<compile_context>
chip_gen: v5e
topology: v5e:2x2
jax: 0.10.0
libtpu: 0.0.40
codegen_flags: <defaults>
</compile_context>

<pallas_src>
import functools

import jax
import jax.numpy as jnp
from jax.experimental import pallas as pl
from jax.experimental.pallas import tpu as pltpu

C_IN, H1, H2, N_CLS = 2048, 128, 256, 4


def head_kernel(x_ref, w1_ref, b1_ref, w2_ref, b2_ref, w3_ref, b3_ref,
                o_ref, acc_ref, *, inv_hw, c_tile):
    """grid = (batch_blocks, channel_blocks); channel axis is the reduction.

    x_ref   : (TB, HW, C_TILE) channels-last slice of the feature map
    w1_ref  : (C_IN, H1) bf16, fully VMEM-resident (constant index_map)
    o_ref   : (1, TB, N_CLS)
    acc_ref : (TB, H1) f32 running accumulator of sum_hw(x) @ w1
    """
    c = pl.program_id(1)

    @pl.when(c == 0)
    def _():
        acc_ref[...] = jnp.zeros_like(acc_ref)

    # Adaptive-avg-pool numerator for this channel slice: sublane reduce over
    # HW (channels are lane-dense on the last axis), accumulated in f32.
    pooled = jnp.sum(x_ref[...].astype(jnp.float32), axis=1)        # (TB, C_TILE)

    # fc1 folded into the channel reduction.  w1 stays resident in VMEM; slice
    # the rows belonging to this channel step and upcast only that slice.
    c0 = pl.multiple_of(c * c_tile, c_tile)
    w1_slice = w1_ref[pl.ds(c0, c_tile), :].astype(jnp.float32)     # (C_TILE, H1)
    acc_ref[...] += jnp.dot(pooled, w1_slice,
                            preferred_element_type=jnp.float32)

    @pl.when(c == pl.num_programs(1) - 1)
    def _():
        # Finalize once per batch block: 1/HW pooling scale, bias, ReLU,
        # fc2 -> ReLU -> fc3 -> softmax(dim=1).  Dropout = identity (eval).
        h = acc_ref[...] * inv_hw + b1_ref[...]
        h = jnp.maximum(h, 0.0)
        h = jnp.dot(h, w2_ref[...], preferred_element_type=jnp.float32) + b2_ref[...]
        h = jnp.maximum(h, 0.0)
        logits = jnp.dot(h, w3_ref[...], preferred_element_type=jnp.float32) + b3_ref[...]
        m = jnp.max(logits, axis=-1, keepdims=True)
        e = jnp.exp(logits - m)
        probs = e / jnp.sum(e, axis=-1, keepdims=True)
        o_ref[...] = probs[None].astype(o_ref.dtype)


def _vmem_capacity_bytes():
    try:
        return int(pltpu.get_tpu_info().vmem_capacity_bytes)
    except Exception:
        return 64 * 1024 * 1024        # conservative fallback (v7x per-TC VMEM)


def _pick_tiles(B, HW, itemsize, budget):
    """Pick (TB, C_TILE) so one x input buffer stays <= `budget` bytes.

    TB ~= ceil(B/2) (capped at 64) so grid[0] >= 2 whenever B >= 2 and both
    v7x TensorCores get batch blocks; C_TILE is the largest multiple of 128
    dividing C_IN that fits the budget (keeps x blocks lane-dense)."""
    hw_pad = -(-HW // 8) * 8                       # sublane padding of dim -2
    tb = max(1, min(-(-B // 2), 64))
    for c_tile in (2048, 1024, 512, 256, 128):
        if tb * hw_pad * c_tile * itemsize <= budget:
            return tb, c_tile
    while tb > 1 and tb * hw_pad * 128 * itemsize > budget:
        tb = max(1, tb // 2)
    return tb, 128


def init_params(key):
    """Deterministic init mimicking PyTorch nn.Linear default (uniform +-1/sqrt(fan_in)).
    Weights are stored (in, out) — i.e. transposed vs torch's (out, in)."""
    ks = jax.random.split(key, 6)

    def lin(kw, kb, fan_in, fan_out):
        bound = 1.0 / jnp.sqrt(fan_in)
        w = jax.random.uniform(kw, (fan_in, fan_out), jnp.float32, -bound, bound)
        b = jax.random.uniform(kb, (1, fan_out), jnp.float32, -bound, bound)
        return w, b

    w1, b1 = lin(ks[0], ks[1], C_IN, H1)
    w2, b2 = lin(ks[2], ks[3], H1, H2)
    w3, b3 = lin(ks[4], ks[5], H2, N_CLS)
    # w1 is the only large weight -> store bf16 (halves its HBM/VMEM bytes);
    # the kernel upcasts the active slice to f32 before the fc1 dot.
    return dict(w1=w1.astype(jnp.bfloat16), b1=b1, w2=w2, b2=b2, w3=w3, b3=b3)


@jax.jit
def custom_resnet_head(x_nhwc, params):
    """x_nhwc: (B, H, W, 2048) channels-last feature map from the backbone
    (the layout XLA TPU convolutions emit)."""
    B, H, W, C = x_nhwc.shape
    assert C == C_IN
    HW = H * W
    x = x_nhwc.reshape(B, HW, C)                  # free view, no HBM pass
    itemsize = jnp.dtype(x_nhwc.dtype).itemsize

    vmem_cap = _vmem_capacity_bytes()
    budget = min(8 * 1024 * 1024, vmem_cap // 12)          # per-x-buffer budget
    TB, C_TILE = _pick_tiles(B, HW, itemsize, budget)
    nb = pl.cdiv(B, TB)
    grid = (nb, C_IN // C_TILE)

    # Explicit scoped-VMEM limit with headroom: 2x-buffered x + resident weights
    # + accumulator/output, never more than 5/8 of physical VMEM.
    hw_pad = -(-HW // 8) * 8
    x_buf = TB * hw_pad * C_TILE * itemsize
    resident = (C_IN * H1 * jnp.dtype(params["w1"].dtype).itemsize
                + (H1 * H2 + H2 * 128 + 3 * 8 * 256) * 4)
    need = 2 * x_buf + 2 * resident + 2 * TB * H1 * 4 + 2 * TB * 128 * 4
    vmem_limit = int(min(vmem_cap * 5 // 8, max(32 * 1024 * 1024, 2 * need)))

    bytes_accessed = int(
        x.size * itemsize
        + params["w1"].size * jnp.dtype(params["w1"].dtype).itemsize
        + (params["w2"].size + params["w3"].size
           + params["b1"].size + params["b2"].size + params["b3"].size) * 4
        + B * N_CLS * 4)
    flops = int(2 * B * HW * C_IN                 # pooling accumulation
                + 2 * B * C_IN * H1 + 2 * B * H1 * H2 + 2 * B * H2 * N_CLS)
    cost = pl.CostEstimate(flops=flops, transcendentals=int(B * N_CLS),
                           bytes_accessed=bytes_accessed)

    kernel = functools.partial(head_kernel, inv_hw=1.0 / HW, c_tile=C_TILE)

    out = pl.pallas_call(
        kernel,
        out_shape=jax.ShapeDtypeStruct((nb, TB, N_CLS), jnp.float32),
        grid_spec=pltpu.PrefetchScalarGridSpec(
            num_scalar_prefetch=0,
            grid=grid,
            in_specs=[
                pl.BlockSpec((TB, HW, C_TILE), lambda b, c: (b, 0, c)),   # x slice
                pl.BlockSpec((C_IN, H1),       lambda b, c: (0, 0)),      # w1 resident
                pl.BlockSpec((1, H1),          lambda b, c: (0, 0)),      # b1
                pl.BlockSpec((H1, H2),         lambda b, c: (0, 0)),      # w2
                pl.BlockSpec((1, H2),          lambda b, c: (0, 0)),      # b2
                pl.BlockSpec((H2, N_CLS),      lambda b, c: (0, 0)),      # w3
                pl.BlockSpec((1, N_CLS),       lambda b, c: (0, 0)),      # b3
            ],
            out_specs=pl.BlockSpec((1, TB, N_CLS), lambda b, c: (b, 0, 0)),
            scratch_shapes=[pltpu.VMEM((TB, H1), jnp.float32)],
        ),
        compiler_params=pltpu.CompilerParams(
            dimension_semantics=("parallel", "arbitrary"),
            vmem_limit_bytes=vmem_limit,
        ),
        cost_estimate=cost,
    )(x, params["w1"], params["b1"], params["w2"], params["b2"],
      params["w3"], params["b3"])

    # Padded batch rows (if B % TB != 0) are dropped here.
    return out.reshape(nb * TB, N_CLS)[:B]


def reference_head(x_nhwc, params):
    """Pure-JAX reference mirroring the PyTorch forward (eval mode)."""
    xf = x_nhwc.astype(jnp.float32)
    feats = jnp.mean(xf, axis=(1, 2))                 # adaptive avg pool + flatten
    h = jnp.maximum(feats @ params["w1"].astype(jnp.float32) + params["b1"], 0.0)
    h = jnp.maximum(h @ params["w2"] + params["b2"], 0.0)
    logits = h @ params["w3"] + params["b3"]
    return jax.nn.softmax(logits, axis=1)


if __name__ == "__main__":
    key = jax.random.PRNGKey(0)
    k_x, k_p = jax.random.split(key)

    # Small, shape-consistent example: batch=2, the 2048-channel feature map
    # the ResNet backbone would emit (channels-last), at a 4x4 spatial extent.
    # x streams in bf16 (halves the dominant HBM bytes); pooling and all FC
    # math accumulate in f32 inside the kernel.
    B, H, W = 2, 4, 4
    x = jax.random.normal(k_x, (B, H, W, C_IN), dtype=jnp.bfloat16)
    params = init_params(k_p)

    out = jax.block_until_ready(custom_resnet_head(x, params))
    ref = reference_head(x, params)

    assert out.shape == (B, N_CLS)
    assert jnp.allclose(out, ref, atol=1e-4, rtol=1e-4), float(jnp.max(jnp.abs(out - ref)))
    assert jnp.allclose(jnp.sum(out, axis=1), 1.0, atol=1e-5)

    print("KERNEL_OK")
</pallas_src>

<mosaic_0001>
module attributes {stable_mosaic.version = 11 : i64} {
  func.func @head_kernel(%arg0: i32, %arg1: i32, %arg2: memref<1x16x2048xbf16, #tpu.memory_space<vmem>>, %arg3: memref<2048x128xbf16, #tpu.memory_space<vmem>>, %arg4: memref<1x128xf32, #tpu.memory_space<vmem>>, %arg5: memref<128x256xf32, #tpu.memory_space<vmem>>, %arg6: memref<1x256xf32, #tpu.memory_space<vmem>>, %arg7: memref<256x4xf32, #tpu.memory_space<vmem>>, %arg8: memref<1x4xf32, #tpu.memory_space<vmem>>, %arg9: memref<1x1x4xf32, #tpu.memory_space<vmem>>, %arg10: memref<1x128xf32, #tpu.memory_space<vmem>>) attributes {dimension_semantics = [#tpu.dimension_semantics<parallel>, #tpu.dimension_semantics<arbitrary>], iteration_bounds = array<i64: 2, 1>, scalar_prefetch = 0 : i64, scratch_operands = 1 : i64, tpu.core_type = #tpu.core_type<tc>, window_params = [{transform_indices = @transform_0, window_bounds = array<i64: 1, 16, 2048>}, {pipeline_mode = #tpu.pipeline_mode<synchronous>, transform_indices = @transform_1, window_bounds = array<i64: 2048, 128>}, {pipeline_mode = #tpu.pipeline_mode<synchronous>, transform_indices = @transform_2, window_bounds = array<i64: 1, 128>}, {pipeline_mode = #tpu.pipeline_mode<synchronous>, transform_indices = @transform_3, window_bounds = array<i64: 128, 256>}, {pipeline_mode = #tpu.pipeline_mode<synchronous>, transform_indices = @transform_4, window_bounds = array<i64: 1, 256>}, {pipeline_mode = #tpu.pipeline_mode<synchronous>, transform_indices = @transform_5, window_bounds = array<i64: 256, 4>}, {pipeline_mode = #tpu.pipeline_mode<synchronous>, transform_indices = @transform_6, window_bounds = array<i64: 1, 4>}, {transform_indices = @transform_7, window_bounds = array<i64: 1, 1, 4>}]} {
    %c0_i32 = arith.constant 0 : i32
    %0 = arith.cmpi eq, %arg1, %c0_i32 : i32
    %1 = arith.extui %0 : i1 to i32
    %c0_i32_0 = arith.constant 0 : i32
    %2 = arith.cmpi ne, %1, %c0_i32_0 : i32
    scf.if %2 {
      %cst_11 = arith.constant 0.000000e+00 : f32
      %18 = vector.broadcast %cst_11 : f32 to vector<1x128xf32>
      %c0_12 = arith.constant 0 : index
      %c0_13 = arith.constant 0 : index
      %19 = vector.load %arg10[%c0_12, %c0_13] : memref<1x128xf32, #tpu.memory_space<vmem>>, vector<1x128xf32>
      tpu.vector_store %arg10[%c0_12, %c0_13], %18 {strides = array<i32>} : memref<1x128xf32, #tpu.memory_space<vmem>>, vector<1x128xf32>,
    } else {
    }
    %c0 = arith.constant 0 : index
    %c0_1 = arith.constant 0 : index
    %c0_2 = arith.constant 0 : index
    %3 = vector.load %arg2[%c0, %c0_1, %c0_2] : memref<1x16x2048xbf16, #tpu.memory_space<vmem>>, vector<1x16x2048xbf16>
    %4 = arith.extf %3 : vector<1x16x2048xbf16> to vector<1x16x2048xf32>
    %cst = arith.constant dense<0.000000e+00> : vector<1x2048xf32>
    %5 = vector.multi_reduction <add>, %4, %cst [1] : vector<1x16x2048xf32> to vector<1x2048xf32>
    %c2048_i32 = arith.constant 2048 : i32
    %6 = arith.muli %arg1, %c2048_i32 : i32
    %7 = tpu.assume_multiple %6, 2048 : i32
    %8 = arith.index_cast %7 : i32 to index
    %c0_3 = arith.constant 0 : index
    %9 = vector.load %arg3[%8, %c0_3] : memref<2048x128xbf16, #tpu.memory_space<vmem>>, vector<2048x128xbf16>
    %10 = arith.extf %9 : vector<2048x128xbf16> to vector<2048x128xf32>
    %c0_4 = arith.constant 0 : index
    %c0_5 = arith.constant 0 : index
    %11 = vector.load %arg10[%c0_4, %c0_5] : memref<1x128xf32, #tpu.memory_space<vmem>>, vector<1x128xf32>
    %cst_6 = arith.constant dense<0.000000e+00> : vector<1x128xf32>
    %12 = tpu.matmul %5, %10, %cst_6 {dimension_numbers = #tpu.dot_dimension_numbers<[1], [0], [0], [1], [0, 0, 1, 1], [], []>} : vector<1x2048xf32>, vector<2048x128xf32>, vector<1x128xf32> -> vector<1x128xf32>
    %13 = arith.addf %11, %12 : vector<1x128xf32>
    %c0_7 = arith.constant 0 : index
    %c0_8 = arith.constant 0 : index
    %14 = vector.load %arg10[%c0_7, %c0_8] : memref<1x128xf32, #tpu.memory_space<vmem>>, vector<1x128xf32>
    tpu.vector_store %arg10[%c0_7, %c0_8], %13 {strides = array<i32>} : memref<1x128xf32, #tpu.memory_space<vmem>>, vector<1x128xf32>,
    %c0_i32_9 = arith.constant 0 : i32
    %15 = arith.cmpi eq, %arg1, %c0_i32_9 : i32
    %16 = arith.extui %15 : i1 to i32
    %c0_i32_10 = arith.constant 0 : i32
    %17 = arith.cmpi ne, %16, %c0_i32_10 : i32
    scf.if %17 {
      %c0_11 = arith.constant 0 : index
      %c0_12 = arith.constant 0 : index
      %18 = vector.load %arg10[%c0_11, %c0_12] : memref<1x128xf32, #tpu.memory_space<vmem>>, vector<1x128xf32>
      %cst_13 = arith.constant 6.250000e-02 : f32
      %19 = vector.broadcast %cst_13 : f32 to vector<1x128xf32>
      %20 = arith.mulf %18, %19 : vector<1x128xf32>
      %c0_14 = arith.constant 0 : index
      %c0_15 = arith.constant 0 : index
      %21 = vector.load %arg4[%c0_14, %c0_15] : memref<1x128xf32, #tpu.memory_space<vmem>>, vector<1x128xf32>
      %22 = arith.addf %20, %21 : vector<1x128xf32>
      %cst_16 = arith.constant 0.000000e+00 : f32
      %23 = vector.broadcast %cst_16 : f32 to vector<1x128xf32>
      %24 = arith.maximumf %22, %23 : vector<1x128xf32>
      %c0_17 = arith.constant 0 : index
      %c0_18 = arith.constant 0 : index
      %25 = vector.load %arg5[%c0_17, %c0_18] : memref<128x256xf32, #tpu.memory_space<vmem>>, vector<128x256xf32>
      %cst_19 = arith.constant dense<0.000000e+00> : vector<1x256xf32>
      %26 = tpu.matmul %24, %25, %cst_19 {dimension_numbers = #tpu.dot_dimension_numbers<[1], [0], [0], [1], [0, 0, 1, 1], [], []>} : vector<1x128xf32>, vector<128x256xf32>, vector<1x256xf32> -> vector<1x256xf32>
      %c0_20 = arith.constant 0 : index
      %c0_21 = arith.constant 0 : index
      %27 = vector.load %arg6[%c0_20, %c0_21] : memref<1x256xf32, #tpu.memory_space<vmem>>, vector<1x256xf32>
      %28 = arith.addf %26, %27 : vector<1x256xf32>
      %cst_22 = arith.constant 0.000000e+00 : f32
      %29 = vector.broadcast %cst_22 : f32 to vector<1x256xf32>
      %30 = arith.maximumf %28, %29 : vector<1x256xf32>
      %c0_23 = arith.constant 0 : index
      %c0_24 = arith.constant 0 : index
      %31 = vector.load %arg7[%c0_23, %c0_24] : memref<256x4xf32, #tpu.memory_space<vmem>>, vector<256x4xf32>
      %cst_25 = arith.constant dense<0.000000e+00> : vector<1x4xf32>
      %32 = tpu.matmul %30, %31, %cst_25 {dimension_numbers = #tpu.dot_dimension_numbers<[1], [0], [0], [1], [0, 0, 1, 1], [], []>} : vector<1x256xf32>, vector<256x4xf32>, vector<1x4xf32> -> vector<1x4xf32>
      %c0_26 = arith.constant 0 : index
      %c0_27 = arith.constant 0 : index
      %33 = vector.load %arg8[%c0_26, %c0_27] : memref<1x4xf32, #tpu.memory_space<vmem>>, vector<1x4xf32>
      %34 = arith.addf %32, %33 : vector<1x4xf32>
      %cst_28 = arith.constant dense<0xFF800000> : vector<1xf32>
      %35 = vector.multi_reduction <maximumf>, %34, %cst_28 [1] : vector<1x4xf32> to vector<1xf32>
      %36 = vector.shape_cast %35 : vector<1xf32> to vector<1x1xf32>
      %37 = vector.broadcast %36 : vector<1x1xf32> to vector<1x4xf32>
      %38 = arith.subf %34, %37 : vector<1x4xf32>
      %39 = math.exp %38 : vector<1x4xf32>
      %cst_29 = arith.constant dense<0.000000e+00> : vector<1xf32>
      %40 = vector.multi_reduction <add>, %39, %cst_29 [1] : vector<1x4xf32> to vector<1xf32>
      %41 = vector.shape_cast %40 : vector<1xf32> to vector<1x1xf32>
      %42 = vector.broadcast %41 : vector<1x1xf32> to vector<1x4xf32>
      %43 = arith.divf %39, %42 : vector<1x4xf32>
      %44 = vector.shape_cast %43 : vector<1x4xf32> to vector<1x1x4xf32>
      %c0_30 = arith.constant 0 : index
      %c0_31 = arith.constant 0 : index
      %c0_32 = arith.constant 0 : index
      %45 = vector.load %arg9[%c0_30, %c0_31, %c0_32] : memref<1x1x4xf32, #tpu.memory_space<vmem>>, vector<1x1x4xf32>
      tpu.vector_store %arg9[%c0_30, %c0_31, %c0_32], %44 {strides = array<i32>} : memref<1x1x4xf32, #tpu.memory_space<vmem>>, vector<1x1x4xf32>,
    } else {
    }
    return
  }
  func.func @transform_0(%arg0: i32, %arg1: i32) -> (i32, i32, i32) {
    %c0_i32 = arith.constant 0 : i32
    %c0_i32_0 = arith.constant 0 : i32
    return %arg0, %c0_i32, %arg1 : i32, i32, i32
  }
  func.func @transform_1(%arg0: i32, %arg1: i32) -> (i32, i32) {
    %c0_i32 = arith.constant 0 : i32
    %c0_i32_0 = arith.constant 0 : i32
    %c0_i32_1 = arith.constant 0 : i32
    return %c0_i32, %c0_i32_0 : i32, i32
  }
  func.func @transform_2(%arg0: i32, %arg1: i32) -> (i32, i32) {
    %c0_i32 = arith.constant 0 : i32
    %c0_i32_0 = arith.constant 0 : i32
    %c0_i32_1 = arith.constant 0 : i32
    return %c0_i32, %c0_i32_0 : i32, i32
  }
  func.func @transform_3(%arg0: i32, %arg1: i32) -> (i32, i32) {
    %c0_i32 = arith.constant 0 : i32
    %c0_i32_0 = arith.constant 0 : i32
    %c0_i32_1 = arith.constant 0 : i32
    return %c0_i32, %c0_i32_0 : i32, i32
  }
  func.func @transform_4(%arg0: i32, %arg1: i32) -> (i32, i32) {
    %c0_i32 = arith.constant 0 : i32
    %c0_i32_0 = arith.constant 0 : i32
    %c0_i32_1 = arith.constant 0 : i32
    return %c0_i32, %c0_i32_0 : i32, i32
  }
  func.func @transform_5(%arg0: i32, %arg1: i32) -> (i32, i32) {
    %c0_i32 = arith.constant 0 : i32
    %c0_i32_0 = arith.constant 0 : i32
    %c0_i32_1 = arith.constant 0 : i32
    return %c0_i32, %c0_i32_0 : i32, i32
  }
  func.func @transform_6(%arg0: i32, %arg1: i32) -> (i32, i32) {
    %c0_i32 = arith.constant 0 : i32
    %c0_i32_0 = arith.constant 0 : i32
    %c0_i32_1 = arith.constant 0 : i32
    return %c0_i32, %c0_i32_0 : i32, i32
  }
  func.func @transform_7(%arg0: i32, %arg1: i32) -> (i32, i32, i32) {
    %c0_i32 = arith.constant 0 : i32
    %c0_i32_0 = arith.constant 0 : i32
    %c0_i32_1 = arith.constant 0 : i32
    return %arg0, %c0_i32, %c0_i32_0 : i32, i32, i32
  }
}

</mosaic_0001>

<llo_original>
// kernel: custom_resnet_head.1
$region0: #{custom_resnet_head.1}
  #allocation0 [shape = 'u32[]', space=smem, size = 0x4, offset = 0x4, fixed_abs, tag = 'smem constant byte address 0x4 - core index']
  #allocation1 [shape = 'u32[72,128]{1,0:T(1,128)}', space=vmem, size = 0x9000, scoped, tag = 'internal scratch']
  #allocation2 [shape = 'f32[1,128]{1,0:T(1,128)}', space=vmem, size = 0x200, scoped, tag = 'scratch operand']
  %s0 = inlined_call_operand.vmem [shape: bf16[2,16,2048], index: 0, kind: input, shape index: {}]
  %s1 = inlined_call_operand.hbm [shape: bf16[2048,128], index: 1, kind: input, shape index: {}]
  %s2 = inlined_call_operand.vmem [shape: f32[1,128], index: 2, kind: input, shape index: {}]
  %s3 = inlined_call_operand.vmem [shape: f32[128,256], index: 3, kind: input, shape index: {}]
  %s4 = inlined_call_operand.vmem [shape: f32[1,256], index: 4, kind: input, shape index: {}]
  %s5 = inlined_call_operand.vmem [shape: f32[256,4], index: 5, kind: input, shape index: {}]
  %s6 = inlined_call_operand.vmem [shape: f32[1,4], index: 6, kind: input, shape index: {}]
  %s7 = inlined_call_operand.hbm [shape: f32[2,1,4], index: 7, kind: output, shape index: {}]
  %s8 = sld [smem:[#allocation0]]
  $region73: #{custom_resnet_head.1} parent=0
    _
  %s10 = ssub.s32 1, %s8
  %s11 = scalar_select 0, %s10, %s8
  $region1: #{custom_resnet_head.1} parent=0
    #allocation3 [shape = 'u8[524288]{0}', space=vmem, size = 0x80000, scoped, tag = 'input window, operand 1, single buffered']
    #allocation4 [shape = 's32[2]{0}', space=sflag, size = 0x8, scoped, tag = 'scoped memory for custom_resnet_head.1']
    #allocation5 [shape = 's32[2]{0}', space=sflag, size = 0x8, scoped, tag = 'scoped memory for custom_resnet_head.1']
    #allocation6 [shape = 'u8[1024]{0}', space=vmem, size = 0x400, scoped, tag = 'output window, operand 0']
    %12 = vsyncpa [#allocation4], 0
    %13 = vsyncpa [#allocation5], 0
    %s14 = scalar_lea.sflag [#allocation5], 1
    %15 = vsyncpa %s14, 0
    loop: start=0, step=1, limit=4
    $region2: #{custom_resnet_head.1} parent=1 // loop_pre_header
      _
    $region3: #{custom_resnet_head.1} parent=1 // loop_header
      %s17 = sphi 0, %s21
      %p18 = scmp.ge.s32.totalorder %s17, 4
      %s24 = sphi 0, %s36
      %s25 = sphi 0, %s32
      %s26 = sphi 0, %s24
      %s27 = sphi 0, %s25
      %s28 = sphi 0, %s26
      %s29 = sphi 0, %s27
      %s41 = sphi 0, %s43
      %s44 = sphi 0, %s41
      %s45 = sphi 0, %s44
      %s61 = sphi 0, %s45
      %s65 = sphi 0, %s65
      %s67 = sphi 0, %s65
      %s68 = sphi 0, %s67
      %s82 = sphi 0, %s68
      %s86 = sphi 0, %s86
      %s88 = sphi 0, %s86
      %s89 = sphi 0, %s88
      %s103 = sphi 0, %s89
      %s107 = sphi 0, %s107
      %s109 = sphi 0, %s107
      %s110 = sphi 0, %s109
      %s124 = sphi 0, %s110
      %s128 = sphi 0, %s128
      %s130 = sphi 0, %s128
      %s131 = sphi 0, %s130
      %s145 = sphi 0, %s131
      %s149 = sphi 0, %s149
      %s151 = sphi 0, %s149
      %s152 = sphi 0, %s151
      %s166 = sphi 0, %s152
      %s170 = sphi 0, %s170
      %s172 = sphi 0, %s170
      %s173 = sphi 0, %s172
      %s187 = sphi 0, %s173
      %s193 = sphi 0, %s195
      %s196 = sphi 0, %s193
      %s197 = sphi 0, %s196
      %s213 = sphi 0, %s197
    $region4: #{custom_resnet_head.1} parent=1 // loop_header_branch
      %20 = sbr.rel (%p18) target = $region8
    $region5: #{custom_resnet_head.1} parent=1 // loop_body
      %s22 = ssub.s32 %s17, 1
      %s23 = ssub.s32 %s17, 2
      %s30 = sadd.s32 1, %s25
      %p31 = scmp.ge.s32.totalorder %s30, 1
      %s32 = scalar_select %p31, 0, %s30
      %s33 = sadd.s32 1, %s24
      %s34 = scalar_select %p31, %s33, %s24
      %p35 = scmp.ge.s32.totalorder %s34, 2
      %s36 = scalar_select %p35, 0, %s34
      %s37 = ssub.s32 %s24, %s36
      %s38 = ssub.s32 %s25, %s32
      %s39 = sor.u32 %s37, %s38
      %p40 = scmp.eq.s32.totalorder %s39, 0
      %s42 = sadd.s32 %s41, 1
      %s43 = scalar_select %p40, %s41, %s42
      %p46 = pneg %p40
      %p47 = scmp.eq.s32.totalorder %s17, 1
      %p48 = por %p46, %p47
      %p49 = scmp.ne.s32.totalorder %s41, %s44
      %p50 = scmp.eq.s32.totalorder %s17, 0
      %p51 = por %p49, %p50
      %p52 = scmp.ne.s32.totalorder %s41, %s44
      %p53 = scmp.eq.s32.totalorder %s22, 1
      %p54 = por %p52, %p53
      %p55 = scmp.ne.s32.totalorder %s44, %s45
      %p56 = scmp.eq.s32.totalorder %s22, 0
      %p57 = por %p55, %p56
      %p58 = scmp.ne.s32.totalorder %s44, %s45
      %p59 = scmp.eq.s32.totalorder %s23, 1
      %p60 = por %p58, %p59
      %p62 = scmp.ne.s32.totalorder %s45, %s61
      %p63 = scmp.eq.s32.totalorder %s23, 0
      %p64 = por %p62, %p63
      %s66 = sadd.s32 %s65, 1
      %p69 = scmp.eq.s32.totalorder %s17, 1
      %p70 = scmp.ne.s32.totalorder %s65, %s67
      %p71 = scmp.eq.s32.totalorder %s17, 0
      %p72 = por %p70, %p71
      %p73 = scmp.ne.s32.totalorder %s65, %s67
      %p74 = scmp.eq.s32.totalorder %s22, 1
      %p75 = por %p73, %p74
      %p76 = scmp.ne.s32.totalorder %s67, %s68
      %p77 = scmp.eq.s32.totalorder %s22, 0
      %p78 = por %p76, %p77
      %p79 = scmp.ne.s32.totalorder %s67, %s68
      %p80 = scmp.eq.s32.totalorder %s23, 1
      %p81 = por %p79, %p80
      %p83 = scmp.ne.s32.totalorder %s68, %s82
      %p84 = scmp.eq.s32.totalorder %s23, 0
      %p85 = por %p83, %p84
      %s87 = sadd.s32 %s86, 1
      %p90 = scmp.eq.s32.totalorder %s17, 1
      %p91 = scmp.ne.s32.totalorder %s86, %s88
      %p92 = scmp.eq.s32.totalorder %s17, 0
      %p93 = por %p91, %p92
      %p94 = scmp.ne.s32.totalorder %s86, %s88
      %p95 = scmp.eq.s32.totalorder %s22, 1
      %p96 = por %p94, %p95
      %p97 = scmp.ne.s32.totalorder %s88, %s89
      %p98 = scmp.eq.s32.totalorder %s22, 0
      %p99 = por %p97, %p98
      %p100 = scmp.ne.s32.totalorder %s88, %s89
      %p101 = scmp.eq.s32.totalorder %s23, 1
      %p102 = por %p100, %p101
      %p104 = scmp.ne.s32.totalorder %s89, %s103
      %p105 = scmp.eq.s32.totalorder %s23, 0
      %p106 = por %p104, %p105
      %s108 = sadd.s32 %s107, 1
      %p111 = scmp.eq.s32.totalorder %s17, 1
      %p112 = scmp.ne.s32.totalorder %s107, %s109
      %p113 = scmp.eq.s32.totalorder %s17, 0
      %p114 = por %p112, %p113
      %p115 = scmp.ne.s32.totalorder %s107, %s109
      %p116 = scmp.eq.s32.totalorder %s22, 1
      %p117 = por %p115, %p116
      %p118 = scmp.ne.s32.totalorder %s109, %s110
      %p119 = scmp.eq.s32.totalorder %s22, 0
      %p120 = por %p118, %p119
      %p121 = scmp.ne.s32.totalorder %s109, %s110
      %p122 = scmp.eq.s32.totalorder %s23, 1
      %p123 = por %p121, %p122
      %p125 = scmp.ne.s32.totalorder %s110, %s124
      %p126 = scmp.eq.s32.totalorder %s23, 0
      %p127 = por %p125, %p126
      %s129 = sadd.s32 %s128, 1
      %p132 = scmp.eq.s32.totalorder %s17, 1
      %p133 = scmp.ne.s32.totalorder %s128, %s130
      %p134 = scmp.eq.s32.totalorder %s17, 0
      %p135 = por %p133, %p134
      %p136 = scmp.ne.s32.totalorder %s128, %s130
      %p137 = scmp.eq.s32.totalorder %s22, 1
      %p138 = por %p136, %p137
      %p139 = scmp.ne.s32.totalorder %s130, %s131
      %p140 = scmp.eq.s32.totalorder %s22, 0
      %p141 = por %p139, %p140
      %p142 = scmp.ne.s32.totalorder %s130, %s131
      %p143 = scmp.eq.s32.totalorder %s23, 1
      %p144 = por %p142, %p143
      %p146 = scmp.ne.s32.totalorder %s131, %s145
      %p147 = scmp.eq.s32.totalorder %s23, 0
      %p148 = por %p146, %p147
      %s150 = sadd.s32 %s149, 1
      %p153 = scmp.eq.s32.totalorder %s17, 1
      %p154 = scmp.ne.s32.totalorder %s149, %s151
      %p155 = scmp.eq.s32.totalorder %s17, 0
      %p156 = por %p154, %p155
      %p157 = scmp.ne.s32.totalorder %s149, %s151
      %p158 = scmp.eq.s32.totalorder %s22, 1
      %p159 = por %p157, %p158
      %p160 = scmp.ne.s32.totalorder %s151, %s152
      %p161 = scmp.eq.s32.totalorder %s22, 0
      %p162 = por %p160, %p161
      %p163 = scmp.ne.s32.totalorder %s151, %s152
      %p164 = scmp.eq.s32.totalorder %s23, 1
      %p165 = por %p163, %p164
      %p167 = scmp.ne.s32.totalorder %s152, %s166
      %p168 = scmp.eq.s32.totalorder %s23, 0
      %p169 = por %p167, %p168
      %s171 = sadd.s32 %s170, 1
      %p174 = scmp.eq.s32.totalorder %s17, 1
      %p175 = scmp.ne.s32.totalorder %s170, %s172
      %p176 = scmp.eq.s32.totalorder %s17, 0
      %p177 = por %p175, %p176
      %p178 = scmp.ne.s32.totalorder %s170, %s172
      %p179 = scmp.eq.s32.totalorder %s22, 1
      %p180 = por %p178, %p179
      %p181 = scmp.ne.s32.totalorder %s172, %s173
      %p182 = scmp.eq.s32.totalorder %s22, 0
      %p183 = por %p181, %p182
      %p184 = scmp.ne.s32.totalorder %s172, %s173
      %p185 = scmp.eq.s32.totalorder %s23, 1
      %p186 = por %p184, %p185
      %p188 = scmp.ne.s32.totalorder %s173, %s187
      %p189 = scmp.eq.s32.totalorder %s23, 0
      %p190 = por %p188, %p189
      %s191 = ssub.s32 %s24, %s36
      %p192 = scmp.eq.s32.totalorder %s191, 0
      %s194 = sadd.s32 %s193, 1
      %s195 = scalar_select %p192, %s193, %s194
      %p198 = pneg %p192
      %p199 = scmp.eq.s32.totalorder %s17, 1
      %p200 = por %p198, %p199
      %p201 = scmp.ne.s32.totalorder %s193, %s196
      %p202 = scmp.eq.s32.totalorder %s17, 0
      %p203 = por %p201, %p202
      %p204 = scmp.ne.s32.totalorder %s193, %s196
      %p205 = scmp.eq.s32.totalorder %s22, 1
      %p206 = por %p204, %p205
      %p207 = scmp.ne.s32.totalorder %s196, %s197
      %p208 = scmp.eq.s32.totalorder %s22, 0
      %p209 = por %p207, %p208
      %p210 = scmp.ne.s32.totalorder %s196, %s197
      %p211 = scmp.eq.s32.totalorder %s23, 1
      %p212 = por %p210, %p211
      %p214 = scmp.ne.s32.totalorder %s197, %s213
      %p215 = scmp.eq.s32.totalorder %s23, 0
      %p216 = por %p214, %p215
      %p217 = scmp.le.s32.totalorder 1, %s17
      %p218 = scmp.lt.s32.totalorder %s17, 3
      %p219 = pnand %p217, %p218
      %p220 = pneg %p219
      // Predicated region
      $region9: #{custom_resnet_head.1} parent=5 // pred_check
        _
      $region10: #{custom_resnet_head.1} parent=5 // pred_check_branch
        %222 = sbr.rel (%p219) target = $region12
      $region11: #{custom_resnet_head.1} parent=5 // pred_region
        %s223 = ssub.s32 %s17, 1
        // Predicated region
        $region13: #{custom_resnet_head.1} parent=11 // pred_check
          %p224 = pneg %p78
        $region14: #{custom_resnet_head.1} parent=11 // pred_check_branch
          %226 = sbr.rel (%p224) target = $region16
        $region15: #{custom_resnet_head.1} parent=11 // pred_region
          %228 = vsyncadd [#allocation4], 0
          %s229 = sshll.u32 %s1, 4
          %s230 = int_to_ptr.hbm [resolvable:$true] %s229
          %s231 = sshll.u32 [#allocation3], 4
          %s232 = int_to_ptr.vmem [resolvable:$true] %s231
          %237 = dma.hbm_to_vmem [thread:$0]  %s230, 16384, %s232, [#allocation4], 64, 64, 4
        $region16: #{custom_resnet_head.1} parent=11 // pred_fallthru
          _
        // Predicated region
        $region17: #{custom_resnet_head.1} parent=11 // pred_check
          %p238 = pneg %p99
        $region18: #{custom_resnet_head.1} parent=11 // pred_check_branch
          %240 = sbr.rel (%p238) target = $region20
        $region19: #{custom_resnet_head.1} parent=11 // pred_region
          _
        $region20: #{custom_resnet_head.1} parent=11 // pred_fallthru
          _
        // Predicated region
        $region21: #{custom_resnet_head.1} parent=11 // pred_check
          %p241 = pneg %p120
        $region22: #{custom_resnet_head.1} parent=11 // pred_check_branch
          %243 = sbr.rel (%p241) target = $region24
        $region23: #{custom_resnet_head.1} parent=11 // pred_region
          _
        $region24: #{custom_resnet_head.1} parent=11 // pred_fallthru
          _
        // Predicated region
        $region25: #{custom_resnet_head.1} parent=11 // pred_check
          %p244 = pneg %p141
        $region26: #{custom_resnet_head.1} parent=11 // pred_check_branch
          %246 = sbr.rel (%p244) target = $region28
        $region27: #{custom_resnet_head.1} parent=11 // pred_region
          _
        $region28: #{custom_resnet_head.1} parent=11 // pred_fallthru
          _
        // Predicated region
        $region29: #{custom_resnet_head.1} parent=11 // pred_check
          %p247 = pneg %p162
        $region30: #{custom_resnet_head.1} parent=11 // pred_check_branch
          %249 = sbr.rel (%p247) target = $region32
        $region31: #{custom_resnet_head.1} parent=11 // pred_region
          _
        $region32: #{custom_resnet_head.1} parent=11 // pred_fallthru
          _
        // Predicated region
        $region33: #{custom_resnet_head.1} parent=11 // pred_check
          %p250 = pneg %p183
        $region34: #{custom_resnet_head.1} parent=11 // pred_check_branch
          %252 = sbr.rel (%p250) target = $region36
        $region35: #{custom_resnet_head.1} parent=11 // pred_region
          _
        $region36: #{custom_resnet_head.1} parent=11 // pred_fallthru
          _
      $region12: #{custom_resnet_head.1} parent=5 // pred_fallthru
        _
      %p253 = scmp.lt.s32.totalorder %s17, 2
      // Predicated region
      $region37: #{custom_resnet_head.1} parent=5 // pred_check
        %p254 = pneg %p253
      $region38: #{custom_resnet_head.1} parent=5 // pred_check_branch
        %256 = sbr.rel (%p254) target = $region40
      $region39: #{custom_resnet_head.1} parent=5 // pred_region
        // Predicated region
        $region41: #{custom_resnet_head.1} parent=39 // pred_check
          %p257 = pneg %p51
        $region42: #{custom_resnet_head.1} parent=39 // pred_check_branch
          %259 = sbr.rel (%p257) target = $region44
        $region43: #{custom_resnet_head.1} parent=39 // pred_region
          %s260 = smul.u32 16, %s25
          %p261 = scmp.lt.s32.totalorder %s24, 1
          %s262 = scalar_select %p261, %s24, 1
          %p263 = scmp.lt.s32.totalorder %s260, 15
          %s264 = scalar_select %p263, %s260, 15
          %s265 = smul.addr %s262, 32
          %s266 = sadd.s32 %s264, %s265
          %s267 = smul.addr %s266, 4
          %s268 = scalar_lea.vmem %s0, %s267
          %s269 = smul.u32 16, %s25
        $region44: #{custom_resnet_head.1} parent=39 // pred_fallthru
          _
      $region40: #{custom_resnet_head.1} parent=5 // pred_fallthru
        _
      %p270 = scmp.le.s32.totalorder 1, %s17
      %p271 = scmp.lt.s32.totalorder %s17, 3
      %p272 = pnand %p270, %p271
      %p273 = pneg %p272
      // Predicated region
      $region45: #{custom_resnet_head.1} parent=5 // pred_check
        _
      $region46: #{custom_resnet_head.1} parent=5 // pred_check_branch
        %275 = sbr.rel (%p272) target = $region48
      $region47: #{custom_resnet_head.1} parent=5 // pred_region
        %s276 = ssub.s32 %s17, 1
        // Predicated region
        $region49: #{custom_resnet_head.1} parent=47 // pred_check
          %p277 = pneg %p78
        $region50: #{custom_resnet_head.1} parent=47 // pred_check_branch
          %279 = sbr.rel (%p277) target = $region52
        $region51: #{custom_resnet_head.1} parent=47 // pred_region
          %281 = dma.done [#allocation4], 16384
        $region52: #{custom_resnet_head.1} parent=47 // pred_fallthru
          _
        %s282 = smul.u32 16, %s27
        %p283 = scmp.lt.s32.totalorder %s26, 1
        %s284 = scalar_select %p283, %s26, 1
        %p285 = scmp.lt.s32.totalorder %s282, 15
        %s286 = scalar_select %p285, %s282, 15
        %s287 = smul.addr %s284, 32
        %s288 = sadd.s32 %s286, %s287
        %s289 = smul.addr %s288, 4
        %s290 = scalar_lea.vmem %s0, %s289
        %p291 = pneg %p57
        %p292 = pneg %p54
        %p293 = pneg %p78
        %p294 = pneg %p75
        %p295 = pneg %p99
        %p296 = pneg %p96
        %p297 = pneg %p120
        %p298 = pneg %p117
        %p299 = pneg %p141
        %p300 = pneg %p138
        %p301 = pneg %p162
        %p302 = pneg %p159
        %p303 = pneg %p183
        %p304 = pneg %p180
        %p305 = pneg %p209
        %p306 = pneg %p206
        %s307 = sand.u32 %s196, 1
        %s308 = scalar_lea.sflag [#allocation5], %s307
        %s309 = sand.u32 %s196, 1
        %s310 = scalar_lea.vmem [#allocation6], %s309
        %s311 = smul.u32 16, %s27
        %p312 = scmp.lt.s32.totalorder %s26, 1
        %s313 = scalar_select %p312, %s26, 1
        %p314 = scmp.lt.s32.totalorder %s311, 15
        %s315 = scalar_select %p314, %s311, 15
        %s316 = smul.addr %s313, 32
        %s317 = sadd.s32 %s315, %s316
        %s318 = smul.addr %s317, 4
        %s319 = scalar_lea.vmem %s0, %s318
        %s320 = smul.u32 16, %s27
        %p321 = scmp.eq.s32.totalorder %s27, 0
        // Predicated region
        $region53: #{custom_resnet_head.1} parent=47 // pred_check
          %p322 = pneg %p321
        $region54: #{custom_resnet_head.1} parent=47 // pred_check_branch
          %324 = sbr.rel (%p322) target = $region56
        $region55: #{custom_resnet_head.1} parent=47 // pred_region
          %325 = vst [vmem:[#allocation2] sm:$0x1] 0.0
        $region56: #{custom_resnet_head.1} parent=47 // pred_fallthru
          _
        %v326 = vld [vmem:[%s319] sm:$0xff]
        %v327 = vld [vmem:[%s319 + $0x8] sm:$0xff]
        %v328 = vld [vmem:[%s319 + $0x10] sm:$0xff]
        %v329 = vld [vmem:[%s319 + $0x18] sm:$0xff]
        %v330 = vld [vmem:[%s319 + $0x20] sm:$0xff]
        %v331 = vld [vmem:[%s319 + $0x28] sm:$0xff]
        %v332 = vld [vmem:[%s319 + $0x30] sm:$0xff]
        %v333 = vld [vmem:[%s319 + $0x38] sm:$0xff]
        %v334 = vld [vmem:[%s319 + $0x40] sm:$0xff]
        %v335 = vld [vmem:[%s319 + $0x48] sm:$0xff]
        %v336 = vld [vmem:[%s319 + $0x50] sm:$0xff]
        %v337 = vld [vmem:[%s319 + $0x58] sm:$0xff]
        %v338 = vld [vmem:[%s319 + $0x60] sm:$0xff]
        %v339 = vld [vmem:[%s319 + $0x68] sm:$0xff]
        %v340 = vld [vmem:[%s319 + $0x70] sm:$0xff]
        %v341 = vld [vmem:[%s319 + $0x78] sm:$0xff]
        %v342 = vunpack.c.l.bf16 %v326
        %v343 = vunpack.c.h.bf16 %v326
        %v344 = vunpack.c.l.bf16 %v327
        %v345 = vunpack.c.h.bf16 %v327
        %v346 = vunpack.c.l.bf16 %v328
        %v347 = vunpack.c.h.bf16 %v328
        %v348 = vunpack.c.l.bf16 %v329
        %v349 = vunpack.c.h.bf16 %v329
        %v350 = vunpack.c.l.bf16 %v330
        %v351 = vunpack.c.h.bf16 %v330
        %v352 = vunpack.c.l.bf16 %v331
        %v353 = vunpack.c.h.bf16 %v331
        %v354 = vunpack.c.l.bf16 %v332
        %v355 = vunpack.c.h.bf16 %v332
        %v356 = vunpack.c.l.bf16 %v333
        %v357 = vunpack.c.h.bf16 %v333
        %v358 = vunpack.c.l.bf16 %v334
        %v359 = vunpack.c.h.bf16 %v334
        %v360 = vunpack.c.l.bf16 %v335
        %v361 = vunpack.c.h.bf16 %v335
        %v362 = vunpack.c.l.bf16 %v336
        %v363 = vunpack.c.h.bf16 %v336
        %v364 = vunpack.c.l.bf16 %v337
        %v365 = vunpack.c.h.bf16 %v337
        %v366 = vunpack.c.l.bf16 %v338
        %v367 = vunpack.c.h.bf16 %v338
        %v368 = vunpack.c.l.bf16 %v339
        %v369 = vunpack.c.h.bf16 %v339
        %v370 = vunpack.c.l.bf16 %v340
        %v371 = vunpack.c.h.bf16 %v340
        %v372 = vunpack.c.l.bf16 %v341
        %v373 = vunpack.c.h.bf16 %v341
        %v374 = vadd.f32 %v342, %v358
        %v375 = vrot.slane %v374, 4
        %v376 = vadd.f32 %v374, %v375
        %v377 = vrot.slane %v376, 2
        %v378 = vadd.f32 %v376, %v377
        %v379 = vrot.slane %v378, 1
        %v380 = vadd.f32 %v378, %v379
        %v381 = vadd.f32 %v343, %v359
        %v382 = vrot.slane %v381, 4
        %v383 = vadd.f32 %v381, %v382
        %v384 = vrot.slane %v383, 2
        %v385 = vadd.f32 %v383, %v384
        %v386 = vrot.slane %v385, 1
        %v387 = vadd.f32 %v385, %v386
        %v388 = vadd.f32 %v344, %v360
        %v389 = vrot.slane %v388, 4
        %v390 = vadd.f32 %v388, %v389
        %v391 = vrot.slane %v390, 2
        %v392 = vadd.f32 %v390, %v391
        %v393 = vrot.slane %v392, 1
        %v394 = vadd.f32 %v392, %v393
        %v395 = vadd.f32 %v345, %v361
        %v396 = vrot.slane %v395, 4
        %v397 = vadd.f32 %v395, %v396
        %v398 = vrot.slane %v397, 2
        %v399 = vadd.f32 %v397, %v398
        %v400 = vrot.slane %v399, 1
        %v401 = vadd.f32 %v399, %v400
        %v402 = vadd.f32 %v346, %v362
        %v403 = vrot.slane %v402, 4
        %v404 = vadd.f32 %v402, %v403
        %v405 = vrot.slane %v404, 2
        %v406 = vadd.f32 %v404, %v405
        %v407 = vrot.slane %v406, 1
        %v408 = vadd.f32 %v406, %v407
        %v409 = vadd.f32 %v347, %v363
        %v410 = vrot.slane %v409, 4
        %v411 = vadd.f32 %v409, %v410
        %v412 = vrot.slane %v411, 2
        %v413 = vadd.f32 %v411, %v412
        %v414 = vrot.slane %v413, 1
        %v415 = vadd.f32 %v413, %v414
        %v416 = vadd.f32 %v348, %v364
        %v417 = vrot.slane %v416, 4
        %v418 = vadd.f32 %v416, %v417
        %v419 = vrot.slane %v418, 2
        %v420 = vadd.f32 %v418, %v419
        %v421 = vrot.slane %v420, 1
        %v422 = vadd.f32 %v420, %v421
        %v423 = vadd.f32 %v349, %v365
        %v424 = vrot.slane %v423, 4
        %v425 = vadd.f32 %v423, %v424
        %v426 = vrot.slane %v425, 2
        %v427 = vadd.f32 %v425, %v426
        %v428 = vrot.slane %v427, 1
        %v429 = vadd.f32 %v427, %v428
        %v430 = vadd.f32 %v350, %v366
        %v431 = vrot.slane %v430, 4
        %v432 = vadd.f32 %v430, %v431
        %v433 = vrot.slane %v432, 2
        %v434 = vadd.f32 %v432, %v433
        %v435 = vrot.slane %v434, 1
        %v436 = vadd.f32 %v434, %v435
        %v437 = vadd.f32 %v351, %v367
        %v438 = vrot.slane %v437, 4
        %v439 = vadd.f32 %v437, %v438
        %v440 = vrot.slane %v439, 2
        %v441 = vadd.f32 %v439, %v440
        %v442 = vrot.slane %v441, 1
        %v443 = vadd.f32 %v441, %v442
        %v444 = vadd.f32 %v352, %v368
        %v445 = vrot.slane %v444, 4
        %v446 = vadd.f32 %v444, %v445
        %v447 = vrot.slane %v446, 2
        %v448 = vadd.f32 %v446, %v447
        %v449 = vrot.slane %v448, 1
        %v450 = vadd.f32 %v448, %v449
        %v451 = vadd.f32 %v353, %v369
        %v452 = vrot.slane %v451, 4
        %v453 = vadd.f32 %v451, %v452
        %v454 = vrot.slane %v453, 2
        %v455 = vadd.f32 %v453, %v454
        %v456 = vrot.slane %v455, 1
        %v457 = vadd.f32 %v455, %v456
        %v458 = vadd.f32 %v354, %v370
        %v459 = vrot.slane %v458, 4
        %v460 = vadd.f32 %v458, %v459
        %v461 = vrot.slane %v460, 2
        %v462 = vadd.f32 %v460, %v461
        %v463 = vrot.slane %v462, 1
        %v464 = vadd.f32 %v462, %v463
        %v465 = vadd.f32 %v355, %v371
        %v466 = vrot.slane %v465, 4
        %v467 = vadd.f32 %v465, %v466
        %v468 = vrot.slane %v467, 2
        %v469 = vadd.f32 %v467, %v468
        %v470 = vrot.slane %v469, 1
        %v471 = vadd.f32 %v469, %v470
        %v472 = vadd.f32 %v356, %v372
        %v473 = vrot.slane %v472, 4
        %v474 = vadd.f32 %v472, %v473
        %v475 = vrot.slane %v474, 2
        %v476 = vadd.f32 %v474, %v475
        %v477 = vrot.slane %v476, 1
        %v478 = vadd.f32 %v476, %v477
        %v479 = vadd.f32 %v357, %v373
        %v480 = vrot.slane %v479, 4
        %v481 = vadd.f32 %v479, %v480
        %v482 = vrot.slane %v481, 2
        %v483 = vadd.f32 %v481, %v482
        %v484 = vrot.slane %v483, 1
        %v485 = vadd.f32 %v483, %v484
        %s486 = smul.u32 %s27, 2048
        %s487 = sshra.s32 %s486, 3
        %s488 = sand.u32 %s486, 7
        %s489 = smul.addr %s487, 4
        %s490 = scalar_lea.vmem [#allocation3], %s489
        %v491 = vld [vmem:[%s490] sm:$0xf]
        %v492 = vld [vmem:[%s490 + $0x4] sm:$0xf]
        %v493 = vld [vmem:[%s490 + $0x8] sm:$0xf]
        %v494 = vld [vmem:[%s490 + $0xc] sm:$0xf]
        %v495 = vld [vmem:[%s490 + $0x10] sm:$0xf]
        %v496 = vld [vmem:[%s490 + $0x14] sm:$0xf]
        %v497 = vld [vmem:[%s490 + $0x18] sm:$0xf]
        %v498 = vld [vmem:[%s490 + $0x1c] sm:$0xf]
        %v499 = vld [vmem:[%s490 + $0x20] sm:$0xf]
        %v500 = vld [vmem:[%s490 + $0x24] sm:$0xf]
        %v501 = vld [vmem:[%s490 + $0x28] sm:$0xf]
        %v502 = vld [vmem:[%s490 + $0x2c] sm:$0xf]
        %v503 = vld [vmem:[%s490 + $0x30] sm:$0xf]
        %v504 = vld [vmem:[%s490 + $0x34] sm:$0xf]
        %v505 = vld [vmem:[%s490 + $0x38] sm:$0xf]
        %v506 = vld [vmem:[%s490 + $0x3c] sm:$0xf]
        %v507 = vld [vmem:[%s490 + $0x40] sm:$0xf]
        %v508 = vld [vmem:[%s490 + $0x44] sm:$0xf]
        %v509 = vld [vmem:[%s490 + $0x48] sm:$0xf]
        %v510 = vld [vmem:[%s490 + $0x4c] sm:$0xf]
        %v511 = vld [vmem:[%s490 + $0x50] sm:$0xf]
        %v512 = vld [vmem:[%s490 + $0x54] sm:$0xf]
        %v513 = vld [vmem:[%s490 + $0x58] sm:$0xf]
        %v514 = vld [vmem:[%s490 + $0x5c] sm:$0xf]
        %v515 = vld [vmem:[%s490 + $0x60] sm:$0xf]
        %v516 = vld [vmem:[%s490 + $0x64] sm:$0xf]
        %v517 = vld [vmem:[%s490 + $0x68] sm:$0xf]
        %v518 = vld [vmem:[%s490 + $0x6c] sm:$0xf]
        %v519 = vld [vmem:[%s490 + $0x70] sm:$0xf]
        %v520 = vld [vmem:[%s490 + $0x74] sm:$0xf]
        %v521 = vld [vmem:[%s490 + $0x78] sm:$0xf]
        %v522 = vld [vmem:[%s490 + $0x7c] sm:$0xf]
        %v523 = vld [vmem:[%s490 + $0x80] sm:$0xf]
        %v524 = vld [vmem:[%s490 + $0x84] sm:$0xf]
        %v525 = vld [vmem:[%s490 + $0x88] sm:$0xf]
        %v526 = vld [vmem:[%s490 + $0x8c] sm:$0xf]
        %v527 = vld [vmem:[%s490 + $0x90] sm:$0xf]
        %v528 = vld [vmem:[%s490 + $0x94] sm:$0xf]
        %v529 = vld [vmem:[%s490 + $0x98] sm:$0xf]
        %v530 = vld [vmem:[%s490 + $0x9c] sm:$0xf]
        %v531 = vld [vmem:[%s490 + $0xa0] sm:$0xf]
        %v532 = vld [vmem:[%s490 + $0xa4] sm:$0xf]
        %v533 = vld [vmem:[%s490 + $0xa8] sm:$0xf]
        %v534 = vld [vmem:[%s490 + $0xac] sm:$0xf]
        %v535 = vld [vmem:[%s490 + $0xb0] sm:$0xf]
        %v536 = vld [vmem:[%s490 + $0xb4] sm:$0xf]
        %v537 = vld [vmem:[%s490 + $0xb8] sm:$0xf]
        %v538 = vld [vmem:[%s490 + $0xbc] sm:$0xf]
        %v539 = vld [vmem:[%s490 + $0xc0] sm:$0xf]
        %v540 = vld [vmem:[%s490 + $0xc4] sm:$0xf]
        %v541 = vld [vmem:[%s490 + $0xc8] sm:$0xf]
        %v542 = vld [vmem:[%s490 + $0xcc] sm:$0xf]
        %v543 = vld [vmem:[%s490 + $0xd0] sm:$0xf]
        %v544 = vld [vmem:[%s490 + $0xd4] sm:$0xf]
        %v545 = vld [vmem:[%s490 + $0xd8] sm:$0xf]
        %v546 = vld [vmem:[%s490 + $0xdc] sm:$0xf]
        %v547 = vld [vmem:[%s490 + $0xe0] sm:$0xf]
        %v548 = vld [vmem:[%s490 + $0xe4] sm:$0xf]
        %v549 = vld [vmem:[%s490 + $0xe8] sm:$0xf]
        %v550 = vld [vmem:[%s490 + $0xec] sm:$0xf]
        %v551 = vld [vmem:[%s490 + $0xf0] sm:$0xf]
        %v552 = vld [vmem:[%s490 + $0xf4] sm:$0xf]
        %v553 = vld [vmem:[%s490 + $0xf8] sm:$0xf]
        %v554 = vld [vmem:[%s490 + $0xfc] sm:$0xf]
        %v555 = vld [vmem:[%s490 + $0x100] sm:$0xf]
        %v556 = vld [vmem:[%s490 + $0x104] sm:$0xf]
        %v557 = vld [vmem:[%s490 + $0x108] sm:$0xf]
        %v558 = vld [vmem:[%s490 + $0x10c] sm:$0xf]
        %v559 = vld [vmem:[%s490 + $0x110] sm:$0xf]
        %v560 = vld [vmem:[%s490 + $0x114] sm:$0xf]
        %v561 = vld [vmem:[%s490 + $0x118] sm:$0xf]
        %v562 = vld [vmem:[%s490 + $0x11c] sm:$0xf]
        %v563 = vld [vmem:[%s490 + $0x120] sm:$0xf]
        %v564 = vld [vmem:[%s490 + $0x124] sm:$0xf]
        %v565 = vld [vmem:[%s490 + $0x128] sm:$0xf]
        %v566 = vld [vmem:[%s490 + $0x12c] sm:$0xf]
        %v567 = vld [vmem:[%s490 + $0x130] sm:$0xf]
        %v568 = vld [vmem:[%s490 + $0x134] sm:$0xf]
        %v569 = vld [vmem:[%s490 + $0x138] sm:$0xf]
        %v570 = vld [vmem:[%s490 + $0x13c] sm:$0xf]
        %v571 = vld [vmem:[%s490 + $0x140] sm:$0xf]
        %v572 = vld [vmem:[%s490 + $0x144] sm:$0xf]
        %v573 = vld [vmem:[%s490 + $0x148] sm:$0xf]
        %v574 = vld [vmem:[%s490 + $0x14c] sm:$0xf]
        %v575 = vld [vmem:[%s490 + $0x150] sm:$0xf]
        %v576 = vld [vmem:[%s490 + $0x154] sm:$0xf]
        %v577 = vld [vmem:[%s490 + $0x158] sm:$0xf]
        %v578 = vld [vmem:[%s490 + $0x15c] sm:$0xf]
        %v579 = vld [vmem:[%s490 + $0x160] sm:$0xf]
        %v580 = vld [vmem:[%s490 + $0x164] sm:$0xf]
        %v581 = vld [vmem:[%s490 + $0x168] sm:$0xf]
        %v582 = vld [vmem:[%s490 + $0x16c] sm:$0xf]
        %v583 = vld [vmem:[%s490 + $0x170] sm:$0xf]
        %v584 = vld [vmem:[%s490 + $0x174] sm:$0xf]
        %v585 = vld [vmem:[%s490 + $0x178] sm:$0xf]
        %v586 = vld [vmem:[%s490 + $0x17c] sm:$0xf]
        %v587 = vld [vmem:[%s490 + $0x180] sm:$0xf]
        %v588 = vld [vmem:[%s490 + $0x184] sm:$0xf]
        %v589 = vld [vmem:[%s490 + $0x188] sm:$0xf]
        %v590 = vld [vmem:[%s490 + $0x18c] sm:$0xf]
        %v591 = vld [vmem:[%s490 + $0x190] sm:$0xf]
        %v592 = vld [vmem:[%s490 + $0x194] sm:$0xf]
        %v593 = vld [vmem:[%s490 + $0x198] sm:$0xf]
        %v594 = vld [vmem:[%s490 + $0x19c] sm:$0xf]
        %v595 = vld [vmem:[%s490 + $0x1a0] sm:$0xf]
        %v596 = vld [vmem:[%s490 + $0x1a4] sm:$0xf]
        %v597 = vld [vmem:[%s490 + $0x1a8] sm:$0xf]
        %v598 = vld [vmem:[%s490 + $0x1ac] sm:$0xf]
        %v599 = vld [vmem:[%s490 + $0x1b0] sm:$0xf]
        %v600 = vld [vmem:[%s490 + $0x1b4] sm:$0xf]
        %v601 = vld [vmem:[%s490 + $0x1b8] sm:$0xf]
        %v602 = vld [vmem:[%s490 + $0x1bc] sm:$0xf]
        %v603 = vld [vmem:[%s490 + $0x1c0] sm:$0xf]
        %v604 = vld [vmem:[%s490 + $0x1c4] sm:$0xf]
        %v605 = vld [vmem:[%s490 + $0x1c8] sm:$0xf]
        %v606 = vld [vmem:[%s490 + $0x1cc] sm:$0xf]
        %v607 = vld [vmem:[%s490 + $0x1d0] sm:$0xf]
        %v608 = vld [vmem:[%s490 + $0x1d4] sm:$0xf]
        %v609 = vld [vmem:[%s490 + $0x1d8] sm:$0xf]
        %v610 = vld [vmem:[%s490 + $0x1dc] sm:$0xf]
        %v611 = vld [vmem:[%s490 + $0x1e0] sm:$0xf]
        %v612 = vld [vmem:[%s490 + $0x1e4] sm:$0xf]
        %v613 = vld [vmem:[%s490 + $0x1e8] sm:$0xf]
        %v614 = vld [vmem:[%s490 + $0x1ec] sm:$0xf]
        %v615 = vld [vmem:[%s490 + $0x1f0] sm:$0xf]
        %v616 = vld [vmem:[%s490 + $0x1f4] sm:$0xf]
        %v617 = vld [vmem:[%s490 + $0x1f8] sm:$0xf]
        %v618 = vld [vmem:[%s490 + $0x1fc] sm:$0xf]
        %v619 = vld [vmem:[%s490 + $0x200] sm:$0xf]
        %v620 = vld [vmem:[%s490 + $0x204] sm:$0xf]
        %v621 = vld [vmem:[%s490 + $0x208] sm:$0xf]
        %v622 = vld [vmem:[%s490 + $0x20c] sm:$0xf]
        %v623 = vld [vmem:[%s490 + $0x210] sm:$0xf]
        %v624 = vld [vmem:[%s490 + $0x214] sm:$0xf]
        %v625 = vld [vmem:[%s490 + $0x218] sm:$0xf]
        %v626 = vld [vmem:[%s490 + $0x21c] sm:$0xf]
        %v627 = vld [vmem:[%s490 + $0x220] sm:$0xf]
        %v628 = vld [vmem:[%s490 + $0x224] sm:$0xf]
        %v629 = vld [vmem:[%s490 + $0x228] sm:$0xf]
        %v630 = vld [vmem:[%s490 + $0x22c] sm:$0xf]
        %v631 = vld [vmem:[%s490 + $0x230] sm:$0xf]
        %v632 = vld [vmem:[%s490 + $0x234] sm:$0xf]
        %v633 = vld [vmem:[%s490 + $0x238] sm:$0xf]
        %v634 = vld [vmem:[%s490 + $0x23c] sm:$0xf]
        %v635 = vld [vmem:[%s490 + $0x240] sm:$0xf]
        %v636 = vld [vmem:[%s490 + $0x244] sm:$0xf]
        %v637 = vld [vmem:[%s490 + $0x248] sm:$0xf]
        %v638 = vld [vmem:[%s490 + $0x24c] sm:$0xf]
        %v639 = vld [vmem:[%s490 + $0x250] sm:$0xf]
        %v640 = vld [vmem:[%s490 + $0x254] sm:$0xf]
        %v641 = vld [vmem:[%s490 + $0x258] sm:$0xf]
        %v642 = vld [vmem:[%s490 + $0x25c] sm:$0xf]
        %v643 = vld [vmem:[%s490 + $0x260] sm:$0xf]
        %v644 = vld [vmem:[%s490 + $0x264] sm:$0xf]
        %v645 = vld [vmem:[%s490 + $0x268] sm:$0xf]
        %v646 = vld [vmem:[%s490 + $0x26c] sm:$0xf]
        %v647 = vld [vmem:[%s490 + $0x270] sm:$0xf]
        %v648 = vld [vmem:[%s490 + $0x274] sm:$0xf]
        %v649 = vld [vmem:[%s490 + $0x278] sm:$0xf]
        %v650 = vld [vmem:[%s490 + $0x27c] sm:$0xf]
        %v651 = vld [vmem:[%s490 + $0x280] sm:$0xf]
        %v652 = vld [vmem:[%s490 + $0x284] sm:$0xf]
        %v653 = vld [vmem:[%s490 + $0x288] sm:$0xf]
        %v654 = vld [vmem:[%s490 + $0x28c] sm:$0xf]
        %v655 = vld [vmem:[%s490 + $0x290] sm:$0xf]
        %v656 = vld [vmem:[%s490 + $0x294] sm:$0xf]
        %v657 = vld [vmem:[%s490 + $0x298] sm:$0xf]
        %v658 = vld [vmem:[%s490 + $0x29c] sm:$0xf]
        %v659 = vld [vmem:[%s490 + $0x2a0] sm:$0xf]
        %v660 = vld [vmem:[%s490 + $0x2a4] sm:$0xf]
        %v661 = vld [vmem:[%s490 + $0x2a8] sm:$0xf]
        %v662 = vld [vmem:[%s490 + $0x2ac] sm:$0xf]
        %v663 = vld [vmem:[%s490 + $0x2b0] sm:$0xf]
        %v664 = vld [vmem:[%s490 + $0x2b4] sm:$0xf]
        %v665 = vld [vmem:[%s490 + $0x2b8] sm:$0xf]
        %v666 = vld [vmem:[%s490 + $0x2bc] sm:$0xf]
        %v667 = vld [vmem:[%s490 + $0x2c0] sm:$0xf]
        %v668 = vld [vmem:[%s490 + $0x2c4] sm:$0xf]
        %v669 = vld [vmem:[%s490 + $0x2c8] sm:$0xf]
        %v670 = vld [vmem:[%s490 + $0x2cc] sm:$0xf]
        %v671 = vld [vmem:[%s490 + $0x2d0] sm:$0xf]
        %v672 = vld [vmem:[%s490 + $0x2d4] sm:$0xf]
        %v673 = vld [vmem:[%s490 + $0x2d8] sm:$0xf]
        %v674 = vld [vmem:[%s490 + $0x2dc] sm:$0xf]
        %v675 = vld [vmem:[%s490 + $0x2e0] sm:$0xf]
        %v676 = vld [vmem:[%s490 + $0x2e4] sm:$0xf]
        %v677 = vld [vmem:[%s490 + $0x2e8] sm:$0xf]
        %v678 = vld [vmem:[%s490 + $0x2ec] sm:$0xf]
        %v679 = vld [vmem:[%s490 + $0x2f0] sm:$0xf]
        %v680 = vld [vmem:[%s490 + $0x2f4] sm:$0xf]
        %v681 = vld [vmem:[%s490 + $0x2f8] sm:$0xf]
        %v682 = vld [vmem:[%s490 + $0x2fc] sm:$0xf]
        %v683 = vld [vmem:[%s490 + $0x300] sm:$0xf]
        %v684 = vld [vmem:[%s490 + $0x304] sm:$0xf]
        %v685 = vld [vmem:[%s490 + $0x308] sm:$0xf]
        %v686 = vld [vmem:[%s490 + $0x30c] sm:$0xf]
        %v687 = vld [vmem:[%s490 + $0x310] sm:$0xf]
        %v688 = vld [vmem:[%s490 + $0x314] sm:$0xf]
        %v689 = vld [vmem:[%s490 + $0x318] sm:$0xf]
        %v690 = vld [vmem:[%s490 + $0x31c] sm:$0xf]
        %v691 = vld [vmem:[%s490 + $0x320] sm:$0xf]
        %v692 = vld [vmem:[%s490 + $0x324] sm:$0xf]
        %v693 = vld [vmem:[%s490 + $0x328] sm:$0xf]
        %v694 = vld [vmem:[%s490 + $0x32c] sm:$0xf]
        %v695 = vld [vmem:[%s490 + $0x330] sm:$0xf]
        %v696 = vld [vmem:[%s490 + $0x334] sm:$0xf]
        %v697 = vld [vmem:[%s490 + $0x338] sm:$0xf]
        %v698 = vld [vmem:[%s490 + $0x33c] sm:$0xf]
        %v699 = vld [vmem:[%s490 + $0x340] sm:$0xf]
        %v700 = vld [vmem:[%s490 + $0x344] sm:$0xf]
        %v701 = vld [vmem:[%s490 + $0x348] sm:$0xf]
        %v702 = vld [vmem:[%s490 + $0x34c] sm:$0xf]
        %v703 = vld [vmem:[%s490 + $0x350] sm:$0xf]
        %v704 = vld [vmem:[%s490 + $0x354] sm:$0xf]
        %v705 = vld [vmem:[%s490 + $0x358] sm:$0xf]
        %v706 = vld [vmem:[%s490 + $0x35c] sm:$0xf]
        %v707 = vld [vmem:[%s490 + $0x360] sm:$0xf]
        %v708 = vld [vmem:[%s490 + $0x364] sm:$0xf]
        %v709 = vld [vmem:[%s490 + $0x368] sm:$0xf]
        %v710 = vld [vmem:[%s490 + $0x36c] sm:$0xf]
        %v711 = vld [vmem:[%s490 + $0x370] sm:$0xf]
        %v712 = vld [vmem:[%s490 + $0x374] sm:$0xf]
        %v713 = vld [vmem:[%s490 + $0x378] sm:$0xf]
        %v714 = vld [vmem:[%s490 + $0x37c] sm:$0xf]
        %v715 = vld [vmem:[%s490 + $0x380] sm:$0xf]
        %v716 = vld [vmem:[%s490 + $0x384] sm:$0xf]
        %v717 = vld [vmem:[%s490 + $0x388] sm:$0xf]
        %v718 = vld [vmem:[%s490 + $0x38c] sm:$0xf]
        %v719 = vld [vmem:[%s490 + $0x390] sm:$0xf]
        %v720 = vld [vmem:[%s490 + $0x394] sm:$0xf]
        %v721 = vld [vmem:[%s490 + $0x398] sm:$0xf]
        %v722 = vld [vmem:[%s490 + $0x39c] sm:$0xf]
        %v723 = vld [vmem:[%s490 + $0x3a0] sm:$0xf]
        %v724 = vld [vmem:[%s490 + $0x3a4] sm:$0xf]
        %v725 = vld [vmem:[%s490 + $0x3a8] sm:$0xf]
        %v726 = vld [vmem:[%s490 + $0x3ac] sm:$0xf]
        %v727 = vld [vmem:[%s490 + $0x3b0] sm:$0xf]
        %v728 = vld [vmem:[%s490 + $0x3b4] sm:$0xf]
        %v729 = vld [vmem:[%s490 + $0x3b8] sm:$0xf]
        %v730 = vld [vmem:[%s490 + $0x3bc] sm:$0xf]
        %v731 = vld [vmem:[%s490 + $0x3c0] sm:$0xf]
        %v732 = vld [vmem:[%s490 + $0x3c4] sm:$0xf]
        %v733 = vld [vmem:[%s490 + $0x3c8] sm:$0xf]
        %v734 = vld [vmem:[%s490 + $0x3cc] sm:$0xf]
        %v735 = vld [vmem:[%s490 + $0x3d0] sm:$0xf]
        %v736 = vld [vmem:[%s490 + $0x3d4] sm:$0xf]
        %v737 = vld [vmem:[%s490 + $0x3d8] sm:$0xf]
        %v738 = vld [vmem:[%s490 + $0x3dc] sm:$0xf]
        %v739 = vld [vmem:[%s490 + $0x3e0] sm:$0xf]
        %v740 = vld [vmem:[%s490 + $0x3e4] sm:$0xf]
        %v741 = vld [vmem:[%s490 + $0x3e8] sm:$0xf]
        %v742 = vld [vmem:[%s490 + $0x3ec] sm:$0xf]
        %v743 = vld [vmem:[%s490 + $0x3f0] sm:$0xf]
        %v744 = vld [vmem:[%s490 + $0x3f4] sm:$0xf]
        %v745 = vld [vmem:[%s490 + $0x3f8] sm:$0xf]
        %v746 = vld [vmem:[%s490 + $0x3fc] sm:$0xf]
        %v747 = vunpack.c.l.bf16 %v491
        %v748 = vunpack.c.l.bf16 %v492
        %v749 = vunpack.c.l.bf16 %v493
        %v750 = vunpack.c.l.bf16 %v494
        %v751 = vunpack.c.l.bf16 %v495
        %v752 = vunpack.c.l.bf16 %v496
        %v753 = vunpack.c.l.bf16 %v497
        %v754 = vunpack.c.l.bf16 %v498
        %v755 = vunpack.c.l.bf16 %v499
        %v756 = vunpack.c.l.bf16 %v500
        %v757 = vunpack.c.l.bf16 %v501
        %v758 = vunpack.c.l.bf16 %v502
        %v759 = vunpack.c.l.bf16 %v503
        %v760 = vunpack.c.l.bf16 %v504
        %v761 = vunpack.c.l.bf16 %v505
        %v762 = vunpack.c.l.bf16 %v506
        %v763 = vunpack.c.l.bf16 %v507
        %v764 = vunpack.c.l.bf16 %v508
        %v765 = vunpack.c.l.bf16 %v509
        %v766 = vunpack.c.l.bf16 %v510
        %v767 = vunpack.c.l.bf16 %v511
        %v768 = vunpack.c.l.bf16 %v512
        %v769 = vunpack.c.l.bf16 %v513
        %v770 = vunpack.c.l.bf16 %v514
        %v771 = vunpack.c.l.bf16 %v515
        %v772 = vunpack.c.l.bf16 %v516
        %v773 = vunpack.c.l.bf16 %v517
        %v774 = vunpack.c.l.bf16 %v518
        %v775 = vunpack.c.l.bf16 %v519
        %v776 = vunpack.c.l.bf16 %v520
        %v777 = vunpack.c.l.bf16 %v521
        %v778 = vunpack.c.l.bf16 %v522
        %v779 = vunpack.c.l.bf16 %v523
        %v780 = vunpack.c.l.bf16 %v524
        %v781 = vunpack.c.l.bf16 %v525
        %v782 = vunpack.c.l.bf16 %v526
        %v783 = vunpack.c.l.bf16 %v527
        %v784 = vunpack.c.l.bf16 %v528
        %v785 = vunpack.c.l.bf16 %v529
        %v786 = vunpack.c.l.bf16 %v530
        %v787 = vunpack.c.l.bf16 %v531
        %v788 = vunpack.c.l.bf16 %v532
        %v789 = vunpack.c.l.bf16 %v533
        %v790 = vunpack.c.l.bf16 %v534
        %v791 = vunpack.c.l.bf16 %v535
        %v792 = vunpack.c.l.bf16 %v536
        %v793 = vunpack.c.l.bf16 %v537
        %v794 = vunpack.c.l.bf16 %v538
        %v795 = vunpack.c.l.bf16 %v539
        %v796 = vunpack.c.l.bf16 %v540
        %v797 = vunpack.c.l.bf16 %v541
        %v798 = vunpack.c.l.bf16 %v542
        %v799 = vunpack.c.l.bf16 %v543
        %v800 = vunpack.c.l.bf16 %v544
        %v801 = vunpack.c.l.bf16 %v545
        %v802 = vunpack.c.l.bf16 %v546
        %v803 = vunpack.c.l.bf16 %v547
        %v804 = vunpack.c.l.bf16 %v548
        %v805 = vunpack.c.l.bf16 %v549
        %v806 = vunpack.c.l.bf16 %v550
        %v807 = vunpack.c.l.bf16 %v551
        %v808 = vunpack.c.l.bf16 %v552
        %v809 = vunpack.c.l.bf16 %v553
        %v810 = vunpack.c.l.bf16 %v554
        %v811 = vunpack.c.l.bf16 %v555
        %v812 = vunpack.c.l.bf16 %v556
        %v813 = vunpack.c.l.bf16 %v557
        %v814 = vunpack.c.l.bf16 %v558
        %v815 = vunpack.c.l.bf16 %v559
        %v816 = vunpack.c.l.bf16 %v560
        %v817 = vunpack.c.l.bf16 %v561
        %v818 = vunpack.c.l.bf16 %v562
        %v819 = vunpack.c.l.bf16 %v563
        %v820 = vunpack.c.l.bf16 %v564
        %v821 = vunpack.c.l.bf16 %v565
        %v822 = vunpack.c.l.bf16 %v566
        %v823 = vunpack.c.l.bf16 %v567
        %v824 = vunpack.c.l.bf16 %v568
        %v825 = vunpack.c.l.bf16 %v569
        %v826 = vunpack.c.l.bf16 %v570
        %v827 = vunpack.c.l.bf16 %v571
        %v828 = vunpack.c.l.bf16 %v572
        %v829 = vunpack.c.l.bf16 %v573
        %v830 = vunpack.c.l.bf16 %v574
        %v831 = vunpack.c.l.bf16 %v575
        %v832 = vunpack.c.l.bf16 %v576
        %v833 = vunpack.c.l.bf16 %v577
        %v834 = vunpack.c.l.bf16 %v578
        %v835 = vunpack.c.l.bf16 %v579
        %v836 = vunpack.c.l.bf16 %v580
        %v837 = vunpack.c.l.bf16 %v581
        %v838 = vunpack.c.l.bf16 %v582
        %v839 = vunpack.c.l.bf16 %v583
        %v840 = vunpack.c.l.bf16 %v584
        %v841 = vunpack.c.l.bf16 %v585
        %v842 = vunpack.c.l.bf16 %v586
        %v843 = vunpack.c.l.bf16 %v587
        %v844 = vunpack.c.l.bf16 %v588
        %v845 = vunpack.c.l.bf16 %v589
        %v846 = vunpack.c.l.bf16 %v590
        %v847 = vunpack.c.l.bf16 %v591
        %v848 = vunpack.c.l.bf16 %v592
        %v849 = vunpack.c.l.bf16 %v593
        %v850 = vunpack.c.l.bf16 %v594
        %v851 = vunpack.c.l.bf16 %v595
        %v852 = vunpack.c.l.bf16 %v596
        %v853 = vunpack.c.l.bf16 %v597
        %v854 = vunpack.c.l.bf16 %v598
        %v855 = vunpack.c.l.bf16 %v599
        %v856 = vunpack.c.l.bf16 %v600
        %v857 = vunpack.c.l.bf16 %v601
        %v858 = vunpack.c.l.bf16 %v602
        %v859 = vunpack.c.l.bf16 %v603
        %v860 = vunpack.c.l.bf16 %v604
        %v861 = vunpack.c.l.bf16 %v605
        %v862 = vunpack.c.l.bf16 %v606
        %v863 = vunpack.c.l.bf16 %v607
        %v864 = vunpack.c.l.bf16 %v608
        %v865 = vunpack.c.l.bf16 %v609
        %v866 = vunpack.c.l.bf16 %v610
        %v867 = vunpack.c.l.bf16 %v611
        %v868 = vunpack.c.l.bf16 %v612
        %v869 = vunpack.c.l.bf16 %v613
        %v870 = vunpack.c.l.bf16 %v614
        %v871 = vunpack.c.l.bf16 %v615
        %v872 = vunpack.c.l.bf16 %v616
        %v873 = vunpack.c.l.bf16 %v617
        %v874 = vunpack.c.l.bf16 %v618
        %v875 = vunpack.c.l.bf16 %v619
        %v876 = vunpack.c.l.bf16 %v620
        %v877 = vunpack.c.l.bf16 %v621
        %v878 = vunpack.c.l.bf16 %v622
        %v879 = vunpack.c.l.bf16 %v623
        %v880 = vunpack.c.l.bf16 %v624
        %v881 = vunpack.c.l.bf16 %v625
        %v882 = vunpack.c.l.bf16 %v626
        %v883 = vunpack.c.l.bf16 %v627
        %v884 = vunpack.c.l.bf16 %v628
        %v885 = vunpack.c.l.bf16 %v629
        %v886 = vunpack.c.l.bf16 %v630
        %v887 = vunpack.c.l.bf16 %v631
        %v888 = vunpack.c.l.bf16 %v632
        %v889 = vunpack.c.l.bf16 %v633
        %v890 = vunpack.c.l.bf16 %v634
        %v891 = vunpack.c.l.bf16 %v635
        %v892 = vunpack.c.l.bf16 %v636
        %v893 = vunpack.c.l.bf16 %v637
        %v894 = vunpack.c.l.bf16 %v638
        %v895 = vunpack.c.l.bf16 %v639
        %v896 = vunpack.c.l.bf16 %v640
        %v897 = vunpack.c.l.bf16 %v641
        %v898 = vunpack.c.l.bf16 %v642
        %v899 = vunpack.c.l.bf16 %v643
        %v900 = vunpack.c.l.bf16 %v644
        %v901 = vunpack.c.l.bf16 %v645
        %v902 = vunpack.c.l.bf16 %v646
        %v903 = vunpack.c.l.bf16 %v647
        %v904 = vunpack.c.l.bf16 %v648
        %v905 = vunpack.c.l.bf16 %v649
        %v906 = vunpack.c.l.bf16 %v650
        %v907 = vunpack.c.l.bf16 %v651
        %v908 = vunpack.c.l.bf16 %v652
        %v909 = vunpack.c.l.bf16 %v653
        %v910 = vunpack.c.l.bf16 %v654
        %v911 = vunpack.c.l.bf16 %v655
        %v912 = vunpack.c.l.bf16 %v656
        %v913 = vunpack.c.l.bf16 %v657
        %v914 = vunpack.c.l.bf16 %v658
        %v915 = vunpack.c.l.bf16 %v659
        %v916 = vunpack.c.l.bf16 %v660
        %v917 = vunpack.c.l.bf16 %v661
        %v918 = vunpack.c.l.bf16 %v662
        %v919 = vunpack.c.l.bf16 %v663
        %v920 = vunpack.c.l.bf16 %v664
        %v921 = vunpack.c.l.bf16 %v665
        %v922 = vunpack.c.l.bf16 %v666
        %v923 = vunpack.c.l.bf16 %v667
        %v924 = vunpack.c.l.bf16 %v668
        %v925 = vunpack.c.l.bf16 %v669
        %v926 = vunpack.c.l.bf16 %v670
        %v927 = vunpack.c.l.bf16 %v671
        %v928 = vunpack.c.l.bf16 %v672
        %v929 = vunpack.c.l.bf16 %v673
        %v930 = vunpack.c.l.bf16 %v674
        %v931 = vunpack.c.l.bf16 %v675
        %v932 = vunpack.c.l.bf16 %v676
        %v933 = vunpack.c.l.bf16 %v677
        %v934 = vunpack.c.l.bf16 %v678
        %v935 = vunpack.c.l.bf16 %v679
        %v936 = vunpack.c.l.bf16 %v680
        %v937 = vunpack.c.l.bf16 %v681
        %v938 = vunpack.c.l.bf16 %v682
        %v939 = vunpack.c.l.bf16 %v683
        %v940 = vunpack.c.l.bf16 %v684
        %v941 = vunpack.c.l.bf16 %v685
        %v942 = vunpack.c.l.bf16 %v686
        %v943 = vunpack.c.l.bf16 %v687
        %v944 = vunpack.c.l.bf16 %v688
        %v945 = vunpack.c.l.bf16 %v689
        %v946 = vunpack.c.l.bf16 %v690
        %v947 = vunpack.c.l.bf16 %v691
        %v948 = vunpack.c.l.bf16 %v692
        %v949 = vunpack.c.l.bf16 %v693
        %v950 = vunpack.c.l.bf16 %v694
        %v951 = vunpack.c.l.bf16 %v695
        %v952 = vunpack.c.l.bf16 %v696
        %v953 = vunpack.c.l.bf16 %v697
        %v954 = vunpack.c.l.bf16 %v698
        %v955 = vunpack.c.l.bf16 %v699
        %v956 = vunpack.c.l.bf16 %v700
        %v957 = vunpack.c.l.bf16 %v701
        %v958 = vunpack.c.l.bf16 %v702
        %v959 = vunpack.c.l.bf16 %v703
        %v960 = vunpack.c.l.bf16 %v704
        %v961 = vunpack.c.l.bf16 %v705
        %v962 = vunpack.c.l.bf16 %v706
        %v963 = vunpack.c.l.bf16 %v707
        %v964 = vunpack.c.l.bf16 %v708
        %v965 = vunpack.c.l.bf16 %v709
        %v966 = vunpack.c.l.bf16 %v710
        %v967 = vunpack.c.l.bf16 %v711
        %v968 = vunpack.c.l.bf16 %v712
        %v969 = vunpack.c.l.bf16 %v713
        %v970 = vunpack.c.l.bf16 %v714
        %v971 = vunpack.c.l.bf16 %v715
        %v972 = vunpack.c.l.bf16 %v716
        %v973 = vunpack.c.l.bf16 %v717
        %v974 = vunpack.c.l.bf16 %v718
        %v975 = vunpack.c.l.bf16 %v719
        %v976 = vunpack.c.l.bf16 %v720
        %v977 = vunpack.c.l.bf16 %v721
        %v978 = vunpack.c.l.bf16 %v722
        %v979 = vunpack.c.l.bf16 %v723
        %v980 = vunpack.c.l.bf16 %v724
        %v981 = vunpack.c.l.bf16 %v725
        %v982 = vunpack.c.l.bf16 %v726
        %v983 = vunpack.c.l.bf16 %v727
        %v984 = vunpack.c.l.bf16 %v728
        %v985 = vunpack.c.l.bf16 %v729
        %v986 = vunpack.c.l.bf16 %v730
        %v987 = vunpack.c.l.bf16 %v731
        %v988 = vunpack.c.l.bf16 %v732
        %v989 = vunpack.c.l.bf16 %v733
        %v990 = vunpack.c.l.bf16 %v734
        %v991 = vunpack.c.l.bf16 %v735
        %v992 = vunpack.c.l.bf16 %v736
        %v993 = vunpack.c.l.bf16 %v737
        %v994 = vunpack.c.l.bf16 %v738
        %v995 = vunpack.c.l.bf16 %v739
        %v996 = vunpack.c.l.bf16 %v740
        %v997 = vunpack.c.l.bf16 %v741
        %v998 = vunpack.c.l.bf16 %v742
        %v999 = vunpack.c.l.bf16 %v743
        %v1000 = vunpack.c.l.bf16 %v744
        %v1001 = vunpack.c.l.bf16 %v745
        %v1002 = vunpack.c.l.bf16 %v746
        %v1003 = vld [vmem:[#allocation2] sm:$0x1]
        %1004 = vmatpush.msra.mxu0 %v762
        %1005 = vmatpush.msra.mxu0 %v761
        %1006 = vmatpush.msra.mxu0 %v760
        %1007 = vmatpush.msra.mxu0 %v759
        %1008 = vmatpush.msra.mxu0 %v758
        %1009 = vmatpush.msra.mxu0 %v757
        %1010 = vmatpush.msra.mxu0 %v756
        %1011 = vmatpush.msra.mxu0 %v755
        %1012 = vmatpush.msra.mxu0 %v754
        %1013 = vmatpush.msra.mxu0 %v753
        %1014 = vmatpush.msra.mxu0 %v752
        %1015 = vmatpush.msra.mxu0 %v751
        %1016 = vmatpush.msra.mxu0 %v750
        %1017 = vmatpush.msra.mxu0 %v749
        %1018 = vmatpush.msra.mxu0 %v748
        %1019 = vmatpush.msra.mxu0 %v747
        %1020 = vmatmul.f32.gmra.mxu0 %v380
        %v1021 = vpop.f32.mrf.mxu0
        %v1022 = vadd.f32 0.0, %v1021
        %1023 = vdwg.mxu0
        %1024 = vmatpush.msra.mxu0 %v778
        %1025 = vmatpush.msra.mxu0 %v777
        %1026 = vmatpush.msra.mxu0 %v776
        %1027 = vmatpush.msra.mxu0 %v775
        %1028 = vmatpush.msra.mxu0 %v774
        %1029 = vmatpush.msra.mxu0 %v773
        %1030 = vmatpush.msra.mxu0 %v772
        %1031 = vmatpush.msra.mxu0 %v771
        %1032 = vmatpush.msra.mxu0 %v770
        %1033 = vmatpush.msra.mxu0 %v769
        %1034 = vmatpush.msra.mxu0 %v768
        %1035 = vmatpush.msra.mxu0 %v767
        %1036 = vmatpush.msra.mxu0 %v766
        %1037 = vmatpush.msra.mxu0 %v765
        %1038 = vmatpush.msra.mxu0 %v764
        %1039 = vmatpush.msra.mxu0 %v763
        %1040 = vmatmul.f32.gmra.mxu0 %v387
        %v1041 = vpop.f32.mrf.mxu0
        %v1042 = vadd.f32 %v1022, %v1041
        %1043 = vdwg.mxu0
        %1044 = vmatpush.msra.mxu0 %v794
        %1045 = vmatpush.msra.mxu0 %v793
        %1046 = vmatpush.msra.mxu0 %v792
        %1047 = vmatpush.msra.mxu0 %v791
        %1048 = vmatpush.msra.mxu0 %v790
        %1049 = vmatpush.msra.mxu0 %v789
        %1050 = vmatpush.msra.mxu0 %v788
        %1051 = vmatpush.msra.mxu0 %v787
        %1052 = vmatpush.msra.mxu0 %v786
        %1053 = vmatpush.msra.mxu0 %v785
        %1054 = vmatpush.msra.mxu0 %v784
        %1055 = vmatpush.msra.mxu0 %v783
        %1056 = vmatpush.msra.mxu0 %v782
        %1057 = vmatpush.msra.mxu0 %v781
        %1058 = vmatpush.msra.mxu0 %v780
        %1059 = vmatpush.msra.mxu0 %v779
        %1060 = vmatmul.f32.gmra.mxu0 %v394
        %v1061 = vpop.f32.mrf.mxu0
        %v1062 = vadd.f32 %v1042, %v1061
        %1063 = vdwg.mxu0
        %1064 = vmatpush.msra.mxu0 %v810
        %1065 = vmatpush.msra.mxu0 %v809
        %1066 = vmatpush.msra.mxu0 %v808
        %1067 = vmatpush.msra.mxu0 %v807
        %1068 = vmatpush.msra.mxu0 %v806
        %1069 = vmatpush.msra.mxu0 %v805
        %1070 = vmatpush.msra.mxu0 %v804
        %1071 = vmatpush.msra.mxu0 %v803
        %1072 = vmatpush.msra.mxu0 %v802
        %1073 = vmatpush.msra.mxu0 %v801
        %1074 = vmatpush.msra.mxu0 %v800
        %1075 = vmatpush.msra.mxu0 %v799
        %1076 = vmatpush.msra.mxu0 %v798
        %1077 = vmatpush.msra.mxu0 %v797
        %1078 = vmatpush.msra.mxu0 %v796
        %1079 = vmatpush.msra.mxu0 %v795
        %1080 = vmatmul.f32.gmra.mxu0 %v401
        %v1081 = vpop.f32.mrf.mxu0
        %v1082 = vadd.f32 %v1062, %v1081
        %1083 = vdwg.mxu0
        %1084 = vmatpush.msra.mxu0 %v826
        %1085 = vmatpush.msra.mxu0 %v825
        %1086 = vmatpush.msra.mxu0 %v824
        %1087 = vmatpush.msra.mxu0 %v823
        %1088 = vmatpush.msra.mxu0 %v822
        %1089 = vmatpush.msra.mxu0 %v821
        %1090 = vmatpush.msra.mxu0 %v820
        %1091 = vmatpush.msra.mxu0 %v819
        %1092 = vmatpush.msra.mxu0 %v818
        %1093 = vmatpush.msra.mxu0 %v817
        %1094 = vmatpush.msra.mxu0 %v816
        %1095 = vmatpush.msra.mxu0 %v815
        %1096 = vmatpush.msra.mxu0 %v814
        %1097 = vmatpush.msra.mxu0 %v813
        %1098 = vmatpush.msra.mxu0 %v812
        %1099 = vmatpush.msra.mxu0 %v811
        %1100 = vmatmul.f32.gmra.mxu0 %v408
        %v1101 = vpop.f32.mrf.mxu0
        %v1102 = vadd.f32 %v1082, %v1101
        %1103 = vdwg.mxu0
        %1104 = vmatpush.msra.mxu0 %v842
        %1105 = vmatpush.msra.mxu0 %v841
        %1106 = vmatpush.msra.mxu0 %v840
        %1107 = vmatpush.msra.mxu0 %v839
        %1108 = vmatpush.msra.mxu0 %v838
        %1109 = vmatpush.msra.mxu0 %v837
        %1110 = vmatpush.msra.mxu0 %v836
        %1111 = vmatpush.msra.mxu0 %v835
        %1112 = vmatpush.msra.mxu0 %v834
        %1113 = vmatpush.msra.mxu0 %v833
        %1114 = vmatpush.msra.mxu0 %v832
        %1115 = vmatpush.msra.mxu0 %v831
        %1116 = vmatpush.msra.mxu0 %v830
        %1117 = vmatpush.msra.mxu0 %v829
        %1118 = vmatpush.msra.mxu0 %v828
        %1119 = vmatpush.msra.mxu0 %v827
        %1120 = vmatmul.f32.gmra.mxu0 %v415
        %v1121 = vpop.f32.mrf.mxu0
        %v1122 = vadd.f32 %v1102, %v1121
        %1123 = vdwg.mxu0
        %1124 = vmatpush.msra.mxu0 %v858
        %1125 = vmatpush.msra.mxu0 %v857
        %1126 = vmatpush.msra.mxu0 %v856
        %1127 = vmatpush.msra.mxu0 %v855
        %1128 = vmatpush.msra.mxu0 %v854
        %1129 = vmatpush.msra.mxu0 %v853
        %1130 = vmatpush.msra.mxu0 %v852
        %1131 = vmatpush.msra.mxu0 %v851
        %1132 = vmatpush.msra.mxu0 %v850
        %1133 = vmatpush.msra.mxu0 %v849
        %1134 = vmatpush.msra.mxu0 %v848
        %1135 = vmatpush.msra.mxu0 %v847
        %1136 = vmatpush.msra.mxu0 %v846
        %1137 = vmatpush.msra.mxu0 %v845
        %1138 = vmatpush.msra.mxu0 %v844
        %1139 = vmatpush.msra.mxu0 %v843
        %1140 = vmatmul.f32.gmra.mxu0 %v422
        %v1141 = vpop.f32.mrf.mxu0
        %v1142 = vadd.f32 %v1122, %v1141
        %1143 = vdwg.mxu0
        %1144 = vmatpush.msra.mxu0 %v874
        %1145 = vmatpush.msra.mxu0 %v873
        %1146 = vmatpush.msra.mxu0 %v872
        %1147 = vmatpush.msra.mxu0 %v871
        %1148 = vmatpush.msra.mxu0 %v870
        %1149 = vmatpush.msra.mxu0 %v869
        %1150 = vmatpush.msra.mxu0 %v868
        %1151 = vmatpush.msra.mxu0 %v867
        %1152 = vmatpush.msra.mxu0 %v866
        %1153 = vmatpush.msra.mxu0 %v865
        %1154 = vmatpush.msra.mxu0 %v864
        %1155 = vmatpush.msra.mxu0 %v863
        %1156 = vmatpush.msra.mxu0 %v862
        %1157 = vmatpush.msra.mxu0 %v861
        %1158 = vmatpush.msra.mxu0 %v860
        %1159 = vmatpush.msra.mxu0 %v859
        %1160 = vmatmul.f32.gmra.mxu0 %v429
        %v1161 = vpop.f32.mrf.mxu0
        %v1162 = vadd.f32 %v1142, %v1161
        %1163 = vdwg.mxu0
        %1164 = vmatpush.msra.mxu0 %v890
        %1165 = vmatpush.msra.mxu0 %v889
        %1166 = vmatpush.msra.mxu0 %v888
        %1167 = vmatpush.msra.mxu0 %v887
        %1168 = vmatpush.msra.mxu0 %v886
        %1169 = vmatpush.msra.mxu0 %v885
        %1170 = vmatpush.msra.mxu0 %v884
        %1171 = vmatpush.msra.mxu0 %v883
        %1172 = vmatpush.msra.mxu0 %v882
        %1173 = vmatpush.msra.mxu0 %v881
        %1174 = vmatpush.msra.mxu0 %v880
        %1175 = vmatpush.msra.mxu0 %v879
        %1176 = vmatpush.msra.mxu0 %v878
        %1177 = vmatpush.msra.mxu0 %v877
        %1178 = vmatpush.msra.mxu0 %v876
        %1179 = vmatpush.msra.mxu0 %v875
        %1180 = vmatmul.f32.gmra.mxu0 %v436
        %v1181 = vpop.f32.mrf.mxu0
        %v1182 = vadd.f32 %v1162, %v1181
        %1183 = vdwg.mxu0
        %1184 = vmatpush.msra.mxu0 %v906
        %1185 = vmatpush.msra.mxu0 %v905
        %1186 = vmatpush.msra.mxu0 %v904
        %1187 = vmatpush.msra.mxu0 %v903
        %1188 = vmatpush.msra.mxu0 %v902
        %1189 = vmatpush.msra.mxu0 %v901
        %1190 = vmatpush.msra.mxu0 %v900
        %1191 = vmatpush.msra.mxu0 %v899
        %1192 = vmatpush.msra.mxu0 %v898
        %1193 = vmatpush.msra.mxu0 %v897
        %1194 = vmatpush.msra.mxu0 %v896
        %1195 = vmatpush.msra.mxu0 %v895
        %1196 = vmatpush.msra.mxu0 %v894
        %1197 = vmatpush.msra.mxu0 %v893
        %1198 = vmatpush.msra.mxu0 %v892
        %1199 = vmatpush.msra.mxu0 %v891
        %1200 = vmatmul.f32.gmra.mxu0 %v443
        %v1201 = vpop.f32.mrf.mxu0
        %v1202 = vadd.f32 %v1182, %v1201
        %1203 = vdwg.mxu0
        %1204 = vmatpush.msra.mxu0 %v922
        %1205 = vmatpush.msra.mxu0 %v921
        %1206 = vmatpush.msra.mxu0 %v920
        %1207 = vmatpush.msra.mxu0 %v919
        %1208 = vmatpush.msra.mxu0 %v918
        %1209 = vmatpush.msra.mxu0 %v917
        %1210 = vmatpush.msra.mxu0 %v916
        %1211 = vmatpush.msra.mxu0 %v915
        %1212 = vmatpush.msra.mxu0 %v914
        %1213 = vmatpush.msra.mxu0 %v913
        %1214 = vmatpush.msra.mxu0 %v912
        %1215 = vmatpush.msra.mxu0 %v911
        %1216 = vmatpush.msra.mxu0 %v910
        %1217 = vmatpush.msra.mxu0 %v909
        %1218 = vmatpush.msra.mxu0 %v908
        %1219 = vmatpush.msra.mxu0 %v907
        %1220 = vmatmul.f32.gmra.mxu0 %v450
        %v1221 = vpop.f32.mrf.mxu0
        %v1222 = vadd.f32 %v1202, %v1221
        %1223 = vdwg.mxu0
        %1224 = vmatpush.msra.mxu0 %v938
        %1225 = vmatpush.msra.mxu0 %v937
        %1226 = vmatpush.msra.mxu0 %v936
        %1227 = vmatpush.msra.mxu0 %v935
        %1228 = vmatpush.msra.mxu0 %v934
        %1229 = vmatpush.msra.mxu0 %v933
        %1230 = vmatpush.msra.mxu0 %v932
        %1231 = vmatpush.msra.mxu0 %v931
        %1232 = vmatpush.msra.mxu0 %v930
        %1233 = vmatpush.msra.mxu0 %v929
        %1234 = vmatpush.msra.mxu0 %v928
        %1235 = vmatpush.msra.mxu0 %v927
        %1236 = vmatpush.msra.mxu0 %v926
        %1237 = vmatpush.msra.mxu0 %v925
        %1238 = vmatpush.msra.mxu0 %v924
        %1239 = vmatpush.msra.mxu0 %v923
        %1240 = vmatmul.f32.gmra.mxu0 %v457
        %v1241 = vpop.f32.mrf.mxu0
        %v1242 = vadd.f32 %v1222, %v1241
        %1243 = vdwg.mxu0
        %1244 = vmatpush.msra.mxu0 %v954
        %1245 = vmatpush.msra.mxu0 %v953
        %1246 = vmatpush.msra.mxu0 %v952
        %1247 = vmatpush.msra.mxu0 %v951
        %1248 = vmatpush.msra.mxu0 %v950
        %1249 = vmatpush.msra.mxu0 %v949
        %1250 = vmatpush.msra.mxu0 %v948
        %1251 = vmatpush.msra.mxu0 %v947
        %1252 = vmatpush.msra.mxu0 %v946
        %1253 = vmatpush.msra.mxu0 %v945
        %1254 = vmatpush.msra.mxu0 %v944
        %1255 = vmatpush.msra.mxu0 %v943
        %1256 = vmatpush.msra.mxu0 %v942
        %1257 = vmatpush.msra.mxu0 %v941
        %1258 = vmatpush.msra.mxu0 %v940
        %1259 = vmatpush.msra.mxu0 %v939
        %1260 = vmatmul.f32.gmra.mxu0 %v464
        %v1261 = vpop.f32.mrf.mxu0
        %v1262 = vadd.f32 %v1242, %v1261
        %1263 = vdwg.mxu0
        %1264 = vmatpush.msra.mxu0 %v970
        %1265 = vmatpush.msra.mxu0 %v969
        %1266 = vmatpush.msra.mxu0 %v968
        %1267 = vmatpush.msra.mxu0 %v967
        %1268 = vmatpush.msra.mxu0 %v966
        %1269 = vmatpush.msra.mxu0 %v965
        %1270 = vmatpush.msra.mxu0 %v964
        %1271 = vmatpush.msra.mxu0 %v963
        %1272 = vmatpush.msra.mxu0 %v962
        %1273 = vmatpush.msra.mxu0 %v961
        %1274 = vmatpush.msra.mxu0 %v960
        %1275 = vmatpush.msra.mxu0 %v959
        %1276 = vmatpush.msra.mxu0 %v958
        %1277 = vmatpush.msra.mxu0 %v957
        %1278 = vmatpush.msra.mxu0 %v956
        %1279 = vmatpush.msra.mxu0 %v955
        %1280 = vmatmul.f32.gmra.mxu0 %v471
        %v1281 = vpop.f32.mrf.mxu0
        %v1282 = vadd.f32 %v1262, %v1281
        %1283 = vdwg.mxu0
        %1284 = vmatpush.msra.mxu0 %v986
        %1285 = vmatpush.msra.mxu0 %v985
        %1286 = vmatpush.msra.mxu0 %v984
        %1287 = vmatpush.msra.mxu0 %v983
        %1288 = vmatpush.msra.mxu0 %v982
        %1289 = vmatpush.msra.mxu0 %v981
        %1290 = vmatpush.msra.mxu0 %v980
        %1291 = vmatpush.msra.mxu0 %v979
        %1292 = vmatpush.msra.mxu0 %v978
        %1293 = vmatpush.msra.mxu0 %v977
        %1294 = vmatpush.msra.mxu0 %v976
        %1295 = vmatpush.msra.mxu0 %v975
        %1296 = vmatpush.msra.mxu0 %v974
        %1297 = vmatpush.msra.mxu0 %v973
        %1298 = vmatpush.msra.mxu0 %v972
        %1299 = vmatpush.msra.mxu0 %v971
        %1300 = vmatmul.f32.gmra.mxu0 %v478
        %v1301 = vpop.f32.mrf.mxu0
        %v1302 = vadd.f32 %v1282, %v1301
        %1303 = vdwg.mxu0
        %1304 = vmatpush.msra.mxu0 %v1002
        %1305 = vmatpush.msra.mxu0 %v1001
        %1306 = vmatpush.msra.mxu0 %v1000
        %1307 = vmatpush.msra.mxu0 %v999
        %1308 = vmatpush.msra.mxu0 %v998
        %1309 = vmatpush.msra.mxu0 %v997
        %1310 = vmatpush.msra.mxu0 %v996
        %1311 = vmatpush.msra.mxu0 %v995
        %1312 = vmatpush.msra.mxu0 %v994
        %1313 = vmatpush.msra.mxu0 %v993
        %1314 = vmatpush.msra.mxu0 %v992
        %1315 = vmatpush.msra.mxu0 %v991
        %1316 = vmatpush.msra.mxu0 %v990
        %1317 = vmatpush.msra.mxu0 %v989
        %1318 = vmatpush.msra.mxu0 %v988
        %1319 = vmatpush.msra.mxu0 %v987
        %1320 = vmatmul.f32.gmra.mxu0 %v485
        %v1321 = vpop.f32.mrf.mxu0
        %v1322 = vadd.f32 %v1302, %v1321
        %1323 = vdwg.mxu0
        %v1324 = vadd.f32 %v1003, %v1322
        %1325 = vst [vmem:[#allocation2] sm:$0x1] %v1324
        // Predicated region
        $region57: #{custom_resnet_head.1} parent=47 // pred_check
          %p1326 = pneg %p321
        $region58: #{custom_resnet_head.1} parent=47 // pred_check_branch
          %1328 = sbr.rel (%p1326) target = $region60
        $region59: #{custom_resnet_head.1} parent=47 // pred_region
          %v1329 = vld [vmem:[#allocation2] sm:$0x1]
          %v1330 = vmul.f32 %v1329, 0.0625
          %v1331 = vld [vmem:[%s2] sm:$0x1]
          %v1332 = vadd.f32 %v1330, %v1331
          %v1333 = vmax.f32 %v1332, 0.0
          %v1334 = vld [vmem:[%s3] sm:$0xff]
          %v1335 = vld [vmem:[%s3 + $0x8] sm:$0xff]
          %v1336 = vld [vmem:[%s3 + $0x10] sm:$0xff]
          %v1337 = vld [vmem:[%s3 + $0x18] sm:$0xff]
          %v1338 = vld [vmem:[%s3 + $0x20] sm:$0xff]
          %v1339 = vld [vmem:[%s3 + $0x28] sm:$0xff]
          %v1340 = vld [vmem:[%s3 + $0x30] sm:$0xff]
          %v1341 = vld [vmem:[%s3 + $0x38] sm:$0xff]
          %v1342 = vld [vmem:[%s3 + $0x40] sm:$0xff]
          %v1343 = vld [vmem:[%s3 + $0x48] sm:$0xff]
          %v1344 = vld [vmem:[%s3 + $0x50] sm:$0xff]
          %v1345 = vld [vmem:[%s3 + $0x58] sm:$0xff]
          %v1346 = vld [vmem:[%s3 + $0x60] sm:$0xff]
          %v1347 = vld [vmem:[%s3 + $0x68] sm:$0xff]
          %v1348 = vld [vmem:[%s3 + $0x70] sm:$0xff]
          %v1349 = vld [vmem:[%s3 + $0x78] sm:$0xff]
          %v1350 = vld [vmem:[%s3 + $0x80] sm:$0xff]
          %v1351 = vld [vmem:[%s3 + $0x88] sm:$0xff]
          %v1352 = vld [vmem:[%s3 + $0x90] sm:$0xff]
          %v1353 = vld [vmem:[%s3 + $0x98] sm:$0xff]
          %v1354 = vld [vmem:[%s3 + $0xa0] sm:$0xff]
          %v1355 = vld [vmem:[%s3 + $0xa8] sm:$0xff]
          %v1356 = vld [vmem:[%s3 + $0xb0] sm:$0xff]
          %v1357 = vld [vmem:[%s3 + $0xb8] sm:$0xff]
          %v1358 = vld [vmem:[%s3 + $0xc0] sm:$0xff]
          %v1359 = vld [vmem:[%s3 + $0xc8] sm:$0xff]
          %v1360 = vld [vmem:[%s3 + $0xd0] sm:$0xff]
          %v1361 = vld [vmem:[%s3 + $0xd8] sm:$0xff]
          %v1362 = vld [vmem:[%s3 + $0xe0] sm:$0xff]
          %v1363 = vld [vmem:[%s3 + $0xe8] sm:$0xff]
          %v1364 = vld [vmem:[%s3 + $0xf0] sm:$0xff]
          %v1365 = vld [vmem:[%s3 + $0xf8] sm:$0xff]
          %v1366 = vld [vmem:[%s4] sm:$0x3]
          %v1368 = vperm.slane %v1366, 0
          %v1369 = vperm.slane %v1366, 1
          %1372 = vmatpush.msra.mxu0 %v1364
          %1373 = vmatpush.msra.mxu0 %v1362
          %1374 = vmatpush.msra.mxu0 %v1360
          %1375 = vmatpush.msra.mxu0 %v1358
          %1376 = vmatpush.msra.mxu0 %v1356
          %1377 = vmatpush.msra.mxu0 %v1354
          %1378 = vmatpush.msra.mxu0 %v1352
          %1379 = vmatpush.msra.mxu0 %v1350
          %1380 = vmatpush.msra.mxu0 %v1348
          %1381 = vmatpush.msra.mxu0 %v1346
          %1382 = vmatpush.msra.mxu0 %v1344
          %1383 = vmatpush.msra.mxu0 %v1342
          %1384 = vmatpush.msra.mxu0 %v1340
          %1385 = vmatpush.msra.mxu0 %v1338
          %1386 = vmatpush.msra.mxu0 %v1336
          %1387 = vmatpush.msra.mxu0 %v1334
          %1388 = vmatmul.f32.gmra.mxu0 %v1333
          %v1389 = vpop.f32.mrf.mxu0
          %v1390 = vadd.f32 %v1368, %v1389
          %1391 = vdwg.mxu0
          %1392 = vmatpush.msra.mxu0 %v1365
          %1393 = vmatpush.msra.mxu0 %v1363
          %1394 = vmatpush.msra.mxu0 %v1361
          %1395 = vmatpush.msra.mxu0 %v1359
          %1396 = vmatpush.msra.mxu0 %v1357
          %1397 = vmatpush.msra.mxu0 %v1355
          %1398 = vmatpush.msra.mxu0 %v1353
          %1399 = vmatpush.msra.mxu0 %v1351
          %1400 = vmatpush.msra.mxu0 %v1349
          %1401 = vmatpush.msra.mxu0 %v1347
          %1402 = vmatpush.msra.mxu0 %v1345
          %1403 = vmatpush.msra.mxu0 %v1343
          %1404 = vmatpush.msra.mxu0 %v1341
          %1405 = vmatpush.msra.mxu0 %v1339
          %1406 = vmatpush.msra.mxu0 %v1337
          %1407 = vmatpush.msra.mxu0 %v1335
          %1408 = vmatmul.f32.gmra.mxu0 %v1333
          %v1409 = vpop.f32.mrf.mxu0
          %v1410 = vadd.f32 %v1369, %v1409
          %1411 = vdwg.mxu0
          %v1412 = vmax.f32 %v1390, 0.0
          %v1413 = vmax.f32 %v1410, 0.0
          %v1414 = vld [vmem:[%s5] sm:$0xff]
          %v1415 = vld [vmem:[%s5 + $0x8] sm:$0xff]
          %v1416 = vld [vmem:[%s5 + $0x10] sm:$0xff]
          %v1417 = vld [vmem:[%s5 + $0x18] sm:$0xff]
          %v1418 = vld [vmem:[%s5 + $0x20] sm:$0xff]
          %v1419 = vld [vmem:[%s5 + $0x28] sm:$0xff]
          %v1420 = vld [vmem:[%s5 + $0x30] sm:$0xff]
          %v1421 = vld [vmem:[%s5 + $0x38] sm:$0xff]
          %v1422 = vld [vmem:[%s5 + $0x40] sm:$0xff]
          %v1423 = vld [vmem:[%s5 + $0x48] sm:$0xff]
          %v1424 = vld [vmem:[%s5 + $0x50] sm:$0xff]
          %v1425 = vld [vmem:[%s5 + $0x58] sm:$0xff]
          %v1426 = vld [vmem:[%s5 + $0x60] sm:$0xff]
          %v1427 = vld [vmem:[%s5 + $0x68] sm:$0xff]
          %v1428 = vld [vmem:[%s5 + $0x70] sm:$0xff]
          %v1429 = vld [vmem:[%s5 + $0x78] sm:$0xff]
          %v1430 = vld [vmem:[%s5 + $0x80] sm:$0xff]
          %v1431 = vld [vmem:[%s5 + $0x88] sm:$0xff]
          %v1432 = vld [vmem:[%s5 + $0x90] sm:$0xff]
          %v1433 = vld [vmem:[%s5 + $0x98] sm:$0xff]
          %v1434 = vld [vmem:[%s5 + $0xa0] sm:$0xff]
          %v1435 = vld [vmem:[%s5 + $0xa8] sm:$0xff]
          %v1436 = vld [vmem:[%s5 + $0xb0] sm:$0xff]
          %v1437 = vld [vmem:[%s5 + $0xb8] sm:$0xff]
          %v1438 = vld [vmem:[%s5 + $0xc0] sm:$0xff]
          %v1439 = vld [vmem:[%s5 + $0xc8] sm:$0xff]
          %v1440 = vld [vmem:[%s5 + $0xd0] sm:$0xff]
          %v1441 = vld [vmem:[%s5 + $0xd8] sm:$0xff]
          %v1442 = vld [vmem:[%s5 + $0xe0] sm:$0xff]
          %v1443 = vld [vmem:[%s5 + $0xe8] sm:$0xff]
          %v1444 = vld [vmem:[%s5 + $0xf0] sm:$0xff]
          %v1445 = vld [vmem:[%s5 + $0xf8] sm:$0xff]
          %v1446 = vld [vmem:[%s6] sm:$0x1]
          %1447 = vmatpush.msra.mxu0 %v1429
          %1448 = vmatpush.msra.mxu0 %v1428
          %1449 = vmatpush.msra.mxu0 %v1427
          %1450 = vmatpush.msra.mxu0 %v1426
          %1451 = vmatpush.msra.mxu0 %v1425
          %1452 = vmatpush.msra.mxu0 %v1424
          %1453 = vmatpush.msra.mxu0 %v1423
          %1454 = vmatpush.msra.mxu0 %v1422
          %1455 = vmatpush.msra.mxu0 %v1421
          %1456 = vmatpush.msra.mxu0 %v1420
          %1457 = vmatpush.msra.mxu0 %v1419
          %1458 = vmatpush.msra.mxu0 %v1418
          %1459 = vmatpush.msra.mxu0 %v1417
          %1460 = vmatpush.msra.mxu0 %v1416
          %1461 = vmatpush.msra.mxu0 %v1415
          %1462 = vmatpush.msra.mxu0 %v1414
          %1463 = vmatmul.f32.gmra.mxu0 %v1412
          %v1464 = vpop.f32.mrf.mxu0
          %v1465 = vadd.f32 %v1446, %v1464
          %1466 = vdwg.mxu0
          %1467 = vmatpush.msra.mxu0 %v1445
          %1468 = vmatpush.msra.mxu0 %v1444
          %1469 = vmatpush.msra.mxu0 %v1443
          %1470 = vmatpush.msra.mxu0 %v1442
          %1471 = vmatpush.msra.mxu0 %v1441
          %1472 = vmatpush.msra.mxu0 %v1440
          %1473 = vmatpush.msra.mxu0 %v1439
          %1474 = vmatpush.msra.mxu0 %v1438
          %1475 = vmatpush.msra.mxu0 %v1437
          %1476 = vmatpush.msra.mxu0 %v1436
          %1477 = vmatpush.msra.mxu0 %v1435
          %1478 = vmatpush.msra.mxu0 %v1434
          %1479 = vmatpush.msra.mxu0 %v1433
          %1480 = vmatpush.msra.mxu0 %v1432
          %1481 = vmatpush.msra.mxu0 %v1431
          %1482 = vmatpush.msra.mxu0 %v1430
          %1483 = vmatmul.f32.gmra.mxu0 %v1413
          %v1484 = vpop.f32.mrf.mxu0
          %v1485 = vadd.f32 %v1465, %v1484
          %1486 = vdwg.mxu0
          %vm1487 = vcmask 24576
          %v1488 = vsel %vm1487, %v1485, -inf
          %1489 = vmax.xlane.f32.xlu0 %v1488
          %v1490 = vpop.xlane.xlu0 %1489
          %v1491 = vsub.f32 %v1485, %v1490
          %v1492 = vmul.f32 %v1491, 1.442695
          %v1493 = vpow.pop %v1492
          %v1494 = vsel %vm1487, %v1493, 0.0
          %1495 = vadd.xlane.f32.xlu0 %v1494
          %v1496 = vpop.xlane.xlu0 %1495
          %v1497 = vrcp.pop %v1496
          %v1498 = vmul.f32 %v1496, %v1497
          %v1499 = vsub.f32 1.0, %v1498
          %v1500 = vmul.f32 %v1497, %v1499
          %v1501 = vadd.f32 %v1497, %v1500
          %vm1502 = vweird.f32 %v1496
          %vm1503 = vweird.f32 %v1497
          %vm1504 = vmor %vm1502, %vm1503
          %v1505 = vsel %vm1504, %v1497, %v1501
          %v1506 = vand.u32 2147483647, %v1496
          %vm1507 = vcmp.eq.f32.partialorder %v1506, 8.507059e+37
          %v1508 = vand.u32 %v1496, 2147483648
          %v1509 = vor.u32 1.1754944e-38, %v1508
          %v1510 = vsel %vm1507, %v1509, %v1505
          %v1511 = vmul.f32 %v1493, %v1510
          %1512 = vst.msk [vmem:[%s310] sm:$0x1] %vm1487, %v1511
        $region60: #{custom_resnet_head.1} parent=47 // pred_fallthru
          _
        %s1513 = sand.u32 %s196, 1
        %s1514 = scalar_lea.sflag [#allocation5], %s1513
        %s1515 = sand.u32 %s196, 1
        %s1516 = scalar_lea.vmem [#allocation6], %s1515
        // Predicated region
        $region61: #{custom_resnet_head.1} parent=47 // pred_check
          %p1517 = pneg %p206
        $region62: #{custom_resnet_head.1} parent=47 // pred_check_branch
          %1519 = sbr.rel (%p1517) target = $region64
        $region63: #{custom_resnet_head.1} parent=47 // pred_region
          %1521 = vsyncadd %s1514, 0
          %s1522 = scalar_lea.hbm %s7, %s26
          %s1524 = sshll.u32 %s1516, 4
          %s1525 = int_to_ptr.vmem [resolvable:$true] %s1524
          %s1526 = sshll.u32 %s1522, 4
          %s1527 = int_to_ptr.hbm [resolvable:$true] %s1526
          %1529 = dma.vmem_to_hbm [thread:$0]  %s1525, 16, %s1527, %s1514
        $region64: #{custom_resnet_head.1} parent=47 // pred_fallthru
          _
      $region48: #{custom_resnet_head.1} parent=5 // pred_fallthru
        _
      %p1530 = scmp.le.s32.totalorder 2, %s17
      // Predicated region
      $region65: #{custom_resnet_head.1} parent=5 // pred_check
        %p1531 = pneg %p1530
      $region66: #{custom_resnet_head.1} parent=5 // pred_check_branch
        %1533 = sbr.rel (%p1531) target = $region68
      $region67: #{custom_resnet_head.1} parent=5 // pred_region
        %s1534 = ssub.s32 %s17, 2
        // Predicated region
        $region69: #{custom_resnet_head.1} parent=67 // pred_check
          %p1535 = pneg %p212
        $region70: #{custom_resnet_head.1} parent=67 // pred_check_branch
          %1537 = sbr.rel (%p1535) target = $region72
        $region71: #{custom_resnet_head.1} parent=67 // pred_region
          %s1538 = sand.u32 %s197, 1
          %s1539 = scalar_lea.sflag [#allocation5], %s1538
          %s1540 = sand.u32 %s197, 1
          %s1541 = scalar_lea.vmem [#allocation6], %s1540
          %1543 = dma.done %s1539, 16
        $region72: #{custom_resnet_head.1} parent=67 // pred_fallthru
          _
      $region68: #{custom_resnet_head.1} parent=5 // pred_fallthru
        _
    $region6: #{custom_resnet_head.1} parent=1 // loop_footer
      %s21 = sadd.s32 1, %s17
    $region7: #{custom_resnet_head.1} parent=1 // loop_footer_branch
      %16 = sbr.rel target = $region3
    $region8: #{custom_resnet_head.1} parent=1 // loop_exit
      _
    %1544 = vsyncpa [#allocation4], 1
    %s1545 = scalar_lea.sflag [#allocation4], 1
    %1546 = vsyncpa %s1545, 1
    %1547 = vsyncpa [#allocation5], 1
    %s1548 = scalar_lea.sflag [#allocation5], 1
    %1549 = vsyncpa %s1548, 1

</llo_original>
